<compile_context>
chip_gen: v7x
topology: tpu7x:2x2x1
jax: 0.10.0
libtpu: 0.0.40
codegen_flags: <defaults>
</compile_context>

<pallas_src>
import functools

import jax
import jax.numpy as jnp
from jax.experimental import pallas as pl
from jax.experimental.pallas import tpu as pltpu


def _tensorcores_per_chip():
    """Best-effort TensorCores-per-device count (v7x/v4/v5p: 2, else 1)."""
    try:
        kind = jax.devices()[0].device_kind.lower().replace(" ", "")
    except Exception:
        return 1
    if any(tag in kind for tag in ("v7", "v4", "v5p")):
        return 2
    return 1


# ---------------------------------------------------------------------------
# Fused Pallas kernel: stem -> temporal shift -> shifted block -> pool -> consensus
# ---------------------------------------------------------------------------

def _tsn_fused_kernel(x_ref, w1_ref, b1_ref, w2_ref, b2_ref, o_ref,
                      h_scr, hs_scr, *, shift_div):
    # x_ref : (b_blk, T, Cin, HW)  channels-first frames, HW lane-dense
    # w1_ref: (C, Cin)  b1_ref: (C, 1)   stem conv, frozen-BN scale folded in
    # w2_ref: (C, C)    b2_ref: (C, 1)   shifted residual-block conv, BN folded
    # o_ref : (b_blk, 1, C)             pooled + segment-averaged features
    # h_scr / hs_scr : (C, b_blk*T*HW)  VMEM staging (stem out / shifted input)
    b_blk, T, Cin, HW = x_ref.shape
    C = w2_ref.shape[0]
    fold = C // shift_div
    n_seg = T * HW

    w1 = w1_ref[...]                          # (C, Cin)
    b1 = b1_ref[...]                          # (C, 1)

    # ---- 1) stem: 1x1 conv (+folded frozen BN) + ReLU ----------------------
    # Cin is tiny (3): three VPU broadcast-FMAs per frame; each frame is
    # written straight into the lane-flattened VMEM slab so live ranges stay
    # bounded to one (C, HW) tile.
    for bb in range(b_blk):
        for t in range(T):
            xt = x_ref[bb, t]                                  # (Cin, HW)
            acc = jnp.zeros((C, HW), jnp.float32)
            for cin in range(Cin):
                acc = acc + w1[:, cin:cin + 1] * xt[cin:cin + 1, :]
            col = (bb * T + t) * HW
            h_scr[:, col:col + HW] = jnp.maximum(acc + b1, 0.0)

    # ---- 2) TSM temporal shift ('blockres', zero-padded per segment) -------
    # Assembled with channel-block / lane-block copies only (shift never
    # crosses a batch element).  2*fold == C/4 == 8 is sublane-aligned for the
    # identity block; the two shifted blocks are fold(=4)-row masked copies.
    zpad = jnp.zeros((fold, HW), jnp.float32)
    hs_scr[2 * fold:, :] = h_scr[2 * fold:, :]                 # identity channels
    for bb in range(b_blk):
        base = bb * n_seg
        # channels [0, fold): take the NEXT frame (shift left); last frame -> 0
        hs_scr[0:fold, base:base + (T - 1) * HW] = \
            h_scr[0:fold, base + HW:base + n_seg]
        hs_scr[0:fold, base + (T - 1) * HW:base + n_seg] = zpad
        # channels [fold, 2*fold): take the PREV frame (shift right); first -> 0
        hs_scr[fold:2 * fold, base + HW:base + n_seg] = \
            h_scr[fold:2 * fold, base:base + (T - 1) * HW]
        hs_scr[fold:2 * fold, base:base + HW] = zpad

    # ---- 3) shifted 1x1 conv: ONE MXU matmul over all b_blk*T frames -------
    # (C, C) x (C, b_blk*T*HW): a single MXU weight push/drain instead of T
    # tiny (C,C)x(C,HW) calls; the lane-dense N keeps the MXU streaming.
    # TODO(synk): at real ResNet widths cast w2 / hs to bf16 (f32 accumulate)
    #             for ~2x MXU rate on v6e/v7x; negligible at C=32.
    y = jnp.dot(w2_ref[...], hs_scr[...],
                preferred_element_type=jnp.float32)            # (C, b_blk*T*HW)

    # ---- 4) folded BN + residual (unshifted h) + ReLU + pool + consensus ----
    b2 = b2_ref[...]                                           # (C, 1)
    inv = 1.0 / float(n_seg)
    for bb in range(b_blk):
        sl = slice(bb * n_seg, (bb + 1) * n_seg)
        yb = jnp.maximum(y[:, sl] + b2 + h_scr[:, sl], 0.0)    # (C, T*HW)
        # AdaptiveAvgPool2d(1) over HW fused with avg consensus over T:
        # a single lane reduction over the whole T*HW slab.
        pooled = jnp.sum(yb, axis=-1) * inv                    # (C,)
        o_ref[bb] = pooled.reshape(1, C)                       # lane-dense store


def fused_tsn_backbone(x, w1f, b1f, w2f, b2f, *, shift_div):
    """x: (B, T, Cin, HW) channels-first -> pooled consensus features (B, 1, C)."""
    B, T, Cin, HW = x.shape
    C = w2f.shape[0]

    # Grid: one step for the whole batch on single-TC chips; split the batch
    # across TensorCores on multi-TC chips (v7x) via a 'parallel' axis.
    n_cores = _tensorcores_per_chip()
    if n_cores > 1 and B % n_cores == 0:
        b_blk = B // n_cores
    else:
        b_blk = B
    grid_b = B // b_blk

    kernel = functools.partial(_tsn_fused_kernel, shift_div=shift_div)
    return pl.pallas_call(
        kernel,
        out_shape=jax.ShapeDtypeStruct((B, 1, C), jnp.float32),
        grid=(grid_b,),
        in_specs=[
            pl.BlockSpec((b_blk, T, Cin, HW), lambda b: (b, 0, 0, 0)),
            pl.BlockSpec((C, Cin), lambda b: (0, 0)),
            pl.BlockSpec((C, 1), lambda b: (0, 0)),
            pl.BlockSpec((C, C), lambda b: (0, 0)),
            pl.BlockSpec((C, 1), lambda b: (0, 0)),
        ],
        out_specs=pl.BlockSpec((b_blk, 1, C), lambda b: (b, 0, 0)),
        scratch_shapes=[
            pltpu.VMEM((C, b_blk * T * HW), jnp.float32),   # h  : stem output
            pltpu.VMEM((C, b_blk * T * HW), jnp.float32),   # hs : shifted conv input
        ],
        compiler_params=pltpu.CompilerParams(
            dimension_semantics=("parallel",)),
    )(x, w1f, b1f, w2f, b2f)


# ---------------------------------------------------------------------------
# Parameters (frozen BN folded into the conv weights at init time)
# ---------------------------------------------------------------------------

def init_params(key, c_in=3, c_feat=32, num_class=10):
    k1, k2, k3 = jax.random.split(key, 3)
    eps = 1e-5
    bn_scale = 1.0 / jnp.sqrt(1.0 + eps)   # frozen BN: gamma=1, beta=0, mean=0, var=1

    # stem 1x1 conv, channels-first (Cout, Cin); BN scale pre-folded into weight.
    w1 = jax.random.normal(k1, (c_feat, c_in), jnp.float32) * 0.1
    w1f = w1 * bn_scale
    b1f = jnp.zeros((c_feat, 1), jnp.float32)

    # shifted residual-block 1x1 conv (Cout, Cin=C); BN folded.
    w2 = jax.random.normal(k2, (c_feat, c_feat), jnp.float32) * 0.05
    w2f = w2 * bn_scale
    b2f = jnp.zeros((c_feat, 1), jnp.float32)

    # new_fc: normal_(weight, 0, 0.001), constant_(bias, 0)  (matches _prepare_tsn)
    w_fc = jax.random.normal(k3, (c_feat, num_class), jnp.float32) * 0.001
    b_fc = jnp.zeros((num_class,), jnp.float32)

    return dict(w1f=w1f, b1f=b1f, w2f=w2f, b2f=b2f, w_fc=w_fc, b_fc=b_fc)


# ---------------------------------------------------------------------------
# TSN forward
# ---------------------------------------------------------------------------

@functools.partial(jax.jit, static_argnames=("num_segments", "shift_div", "new_length"))
def tsn_forward(x_nchw, params, *, num_segments, shift_div=8, new_length=1):
    """x_nchw: (B, T*3*new_length, H, W)  ->  (B, num_class)."""
    B, CT, H, W = x_nchw.shape
    sample_len = 3 * new_length
    # input.view((-1, sample_len) + input.size()[-2:]) in channels-first form;
    # pure metadata reshape of NCHW -- no transpose, no HBM copy.
    x = x_nchw.reshape(B, num_segments, sample_len, H * W)

    # Fused backbone: stem + TSM shift + shifted residual block + pool + avg
    # consensus over segments, all in one pallas_call.
    feat = fused_tsn_backbone(x, params["w1f"], params["b1f"],
                              params["w2f"], params["b2f"],
                              shift_div=shift_div)            # (B, 1, C) lane-dense
    feats = feat[:, 0, :]                                     # (B, C)

    # base_model.fc was replaced by Dropout(p=0.8): eval-mode identity here.
    # new_fc is linear, so consensus-before-FC is exact; the matmul is tiny
    # (B x C x num_class) -> plain JAX, no kernel dispatch.
    out = feats @ params["w_fc"] + params["b_fc"]             # (B, num_class)
    return out


# ---------------------------------------------------------------------------

if __name__ == "__main__":
    B, T, H, W = 2, 4, 16, 16
    C_FEAT, NUM_CLASS = 32, 10

    key = jax.random.PRNGKey(0)
    k_x, k_p = jax.random.split(key)
    # PyTorch-style NCHW clip: (B, T*3, H, W)
    x = jax.random.normal(k_x, (B, T * 3, H, W), jnp.float32)
    params = init_params(k_p, c_in=3, c_feat=C_FEAT, num_class=NUM_CLASS)

    out = tsn_forward(x, params, num_segments=T, shift_div=8, new_length=1)
    out = jax.block_until_ready(out)
    assert out.shape == (B, NUM_CLASS), out.shape
    print("KERNEL_OK")
</pallas_src>

<mosaic_0001>
module attributes {stable_mosaic.version = 11 : i64} {
  func.func @_tsn_fused_kernel(%arg0: i32, %arg1: memref<2x4x3x256xf32, #tpu.memory_space<vmem>>, %arg2: memref<32x3xf32, #tpu.memory_space<vmem>>, %arg3: memref<32x1xf32, #tpu.memory_space<vmem>>, %arg4: memref<32x32xf32, #tpu.memory_space<vmem>>, %arg5: memref<32x1xf32, #tpu.memory_space<vmem>>, %arg6: memref<2x1x32xf32, #tpu.memory_space<vmem>>, %arg7: memref<32x2048xf32, #tpu.memory_space<vmem>>, %arg8: memref<32x2048xf32, #tpu.memory_space<vmem>>) attributes {dimension_semantics = [#tpu.dimension_semantics<parallel>], iteration_bounds = array<i64: 1>, scalar_prefetch = 0 : i64, scratch_operands = 2 : i64, tpu.core_type = #tpu.core_type<tc>, window_params = [{transform_indices = @transform_0, window_bounds = array<i64: 2, 4, 3, 256>}, {pipeline_mode = #tpu.pipeline_mode<synchronous>, transform_indices = @transform_1, window_bounds = array<i64: 32, 3>}, {pipeline_mode = #tpu.pipeline_mode<synchronous>, transform_indices = @transform_2, window_bounds = array<i64: 32, 1>}, {pipeline_mode = #tpu.pipeline_mode<synchronous>, transform_indices = @transform_3, window_bounds = array<i64: 32, 32>}, {pipeline_mode = #tpu.pipeline_mode<synchronous>, transform_indices = @transform_4, window_bounds = array<i64: 32, 1>}, {transform_indices = @transform_5, window_bounds = array<i64: 2, 1, 32>}]} {
    %c0 = arith.constant 0 : index
    %c0_0 = arith.constant 0 : index
    %0 = vector.load %arg2[%c0, %c0_0] : memref<32x3xf32, #tpu.memory_space<vmem>>, vector<32x3xf32>
    %c0_1 = arith.constant 0 : index
    %c0_2 = arith.constant 0 : index
    %1 = vector.load %arg3[%c0_1, %c0_2] : memref<32x1xf32, #tpu.memory_space<vmem>>, vector<32x1xf32>
    %c0_3 = arith.constant 0 : index
    %c0_4 = arith.constant 0 : index
    %c0_5 = arith.constant 0 : index
    %c0_6 = arith.constant 0 : index
    %2 = vector.load %arg1[%c0_3, %c0_4, %c0_5, %c0_6] : memref<2x4x3x256xf32, #tpu.memory_space<vmem>>, vector<1x1x3x256xf32>
    %3 = vector.shape_cast %2 : vector<1x1x3x256xf32> to vector<3x256xf32>
    %cst = arith.constant 0.000000e+00 : f32
    %4 = vector.broadcast %cst : f32 to vector<32x256xf32>
    %5 = vector.extract_strided_slice %0 {offsets = [0, 0], sizes = [32, 1], strides = [1, 1]} : vector<32x3xf32> to vector<32x1xf32>
    %6 = vector.extract_strided_slice %3 {offsets = [0, 0], sizes = [1, 256], strides = [1, 1]} : vector<3x256xf32> to vector<1x256xf32>
    %7 = vector.broadcast %5 : vector<32x1xf32> to vector<32x256xf32>
    %8 = vector.broadcast %6 : vector<1x256xf32> to vector<32x256xf32>
    %9 = arith.mulf %7, %8 : vector<32x256xf32>
    %10 = arith.addf %4, %9 : vector<32x256xf32>
    %11 = vector.extract_strided_slice %0 {offsets = [0, 1], sizes = [32, 1], strides = [1, 1]} : vector<32x3xf32> to vector<32x1xf32>
    %12 = vector.extract_strided_slice %3 {offsets = [1, 0], sizes = [1, 256], strides = [1, 1]} : vector<3x256xf32> to vector<1x256xf32>
    %13 = vector.broadcast %11 : vector<32x1xf32> to vector<32x256xf32>
    %14 = vector.broadcast %12 : vector<1x256xf32> to vector<32x256xf32>
    %15 = arith.mulf %13, %14 : vector<32x256xf32>
    %16 = arith.addf %10, %15 : vector<32x256xf32>
    %17 = vector.extract_strided_slice %0 {offsets = [0, 2], sizes = [32, 1], strides = [1, 1]} : vector<32x3xf32> to vector<32x1xf32>
    %18 = vector.extract_strided_slice %3 {offsets = [2, 0], sizes = [1, 256], strides = [1, 1]} : vector<3x256xf32> to vector<1x256xf32>
    %19 = vector.broadcast %17 : vector<32x1xf32> to vector<32x256xf32>
    %20 = vector.broadcast %18 : vector<1x256xf32> to vector<32x256xf32>
    %21 = arith.mulf %19, %20 : vector<32x256xf32>
    %22 = arith.addf %16, %21 : vector<32x256xf32>
    %23 = vector.broadcast %1 : vector<32x1xf32> to vector<32x256xf32>
    %24 = arith.addf %22, %23 : vector<32x256xf32>
    %cst_7 = arith.constant 0.000000e+00 : f32
    %25 = vector.broadcast %cst_7 : f32 to vector<32x256xf32>
    %26 = arith.maximumf %24, %25 : vector<32x256xf32>
    %c0_8 = arith.constant 0 : index
    %c0_9 = arith.constant 0 : index
    %27 = vector.load %arg7[%c0_8, %c0_9] : memref<32x2048xf32, #tpu.memory_space<vmem>>, vector<32x256xf32>
    tpu.vector_store %arg7[%c0_8, %c0_9], %26 {strides = array<i32>} : memref<32x2048xf32, #tpu.memory_space<vmem>>, vector<32x256xf32>,
    %c0_10 = arith.constant 0 : index
    %c1 = arith.constant 1 : index
    %c0_11 = arith.constant 0 : index
    %c0_12 = arith.constant 0 : index
    %28 = vector.load %arg1[%c0_10, %c1, %c0_11, %c0_12] : memref<2x4x3x256xf32, #tpu.memory_space<vmem>>, vector<1x1x3x256xf32>
    %29 = vector.shape_cast %28 : vector<1x1x3x256xf32> to vector<3x256xf32>
    %cst_13 = arith.constant 0.000000e+00 : f32
    %30 = vector.broadcast %cst_13 : f32 to vector<32x256xf32>
    %31 = vector.extract_strided_slice %0 {offsets = [0, 0], sizes = [32, 1], strides = [1, 1]} : vector<32x3xf32> to vector<32x1xf32>
    %32 = vector.extract_strided_slice %29 {offsets = [0, 0], sizes = [1, 256], strides = [1, 1]} : vector<3x256xf32> to vector<1x256xf32>
    %33 = vector.broadcast %31 : vector<32x1xf32> to vector<32x256xf32>
    %34 = vector.broadcast %32 : vector<1x256xf32> to vector<32x256xf32>
    %35 = arith.mulf %33, %34 : vector<32x256xf32>
    %36 = arith.addf %30, %35 : vector<32x256xf32>
    %37 = vector.extract_strided_slice %0 {offsets = [0, 1], sizes = [32, 1], strides = [1, 1]} : vector<32x3xf32> to vector<32x1xf32>
    %38 = vector.extract_strided_slice %29 {offsets = [1, 0], sizes = [1, 256], strides = [1, 1]} : vector<3x256xf32> to vector<1x256xf32>
    %39 = vector.broadcast %37 : vector<32x1xf32> to vector<32x256xf32>
    %40 = vector.broadcast %38 : vector<1x256xf32> to vector<32x256xf32>
    %41 = arith.mulf %39, %40 : vector<32x256xf32>
    %42 = arith.addf %36, %41 : vector<32x256xf32>
    %43 = vector.extract_strided_slice %0 {offsets = [0, 2], sizes = [32, 1], strides = [1, 1]} : vector<32x3xf32> to vector<32x1xf32>
    %44 = vector.extract_strided_slice %29 {offsets = [2, 0], sizes = [1, 256], strides = [1, 1]} : vector<3x256xf32> to vector<1x256xf32>
    %45 = vector.broadcast %43 : vector<32x1xf32> to vector<32x256xf32>
    %46 = vector.broadcast %44 : vector<1x256xf32> to vector<32x256xf32>
    %47 = arith.mulf %45, %46 : vector<32x256xf32>
    %48 = arith.addf %42, %47 : vector<32x256xf32>
    %49 = vector.broadcast %1 : vector<32x1xf32> to vector<32x256xf32>
    %50 = arith.addf %48, %49 : vector<32x256xf32>
    %cst_14 = arith.constant 0.000000e+00 : f32
    %51 = vector.broadcast %cst_14 : f32 to vector<32x256xf32>
    %52 = arith.maximumf %50, %51 : vector<32x256xf32>
    %c0_15 = arith.constant 0 : index
    %c256 = arith.constant 256 : index
    %53 = vector.load %arg7[%c0_15, %c256] : memref<32x2048xf32, #tpu.memory_space<vmem>>, vector<32x256xf32>
    tpu.vector_store %arg7[%c0_15, %c256], %52 {strides = array<i32>} : memref<32x2048xf32, #tpu.memory_space<vmem>>, vector<32x256xf32>,
    %c0_16 = arith.constant 0 : index
    %c2 = arith.constant 2 : index
    %c0_17 = arith.constant 0 : index
    %c0_18 = arith.constant 0 : index
    %54 = vector.load %arg1[%c0_16, %c2, %c0_17, %c0_18] : memref<2x4x3x256xf32, #tpu.memory_space<vmem>>, vector<1x1x3x256xf32>
    %55 = vector.shape_cast %54 : vector<1x1x3x256xf32> to vector<3x256xf32>
    %cst_19 = arith.constant 0.000000e+00 : f32
    %56 = vector.broadcast %cst_19 : f32 to vector<32x256xf32>
    %57 = vector.extract_strided_slice %0 {offsets = [0, 0], sizes = [32, 1], strides = [1, 1]} : vector<32x3xf32> to vector<32x1xf32>
    %58 = vector.extract_strided_slice %55 {offsets = [0, 0], sizes = [1, 256], strides = [1, 1]} : vector<3x256xf32> to vector<1x256xf32>
    %59 = vector.broadcast %57 : vector<32x1xf32> to vector<32x256xf32>
    %60 = vector.broadcast %58 : vector<1x256xf32> to vector<32x256xf32>
    %61 = arith.mulf %59, %60 : vector<32x256xf32>
    %62 = arith.addf %56, %61 : vector<32x256xf32>
    %63 = vector.extract_strided_slice %0 {offsets = [0, 1], sizes = [32, 1], strides = [1, 1]} : vector<32x3xf32> to vector<32x1xf32>
    %64 = vector.extract_strided_slice %55 {offsets = [1, 0], sizes = [1, 256], strides = [1, 1]} : vector<3x256xf32> to vector<1x256xf32>
    %65 = vector.broadcast %63 : vector<32x1xf32> to vector<32x256xf32>
    %66 = vector.broadcast %64 : vector<1x256xf32> to vector<32x256xf32>
    %67 = arith.mulf %65, %66 : vector<32x256xf32>
    %68 = arith.addf %62, %67 : vector<32x256xf32>
    %69 = vector.extract_strided_slice %0 {offsets = [0, 2], sizes = [32, 1], strides = [1, 1]} : vector<32x3xf32> to vector<32x1xf32>
    %70 = vector.extract_strided_slice %55 {offsets = [2, 0], sizes = [1, 256], strides = [1, 1]} : vector<3x256xf32> to vector<1x256xf32>
    %71 = vector.broadcast %69 : vector<32x1xf32> to vector<32x256xf32>
    %72 = vector.broadcast %70 : vector<1x256xf32> to vector<32x256xf32>
    %73 = arith.mulf %71, %72 : vector<32x256xf32>
    %74 = arith.addf %68, %73 : vector<32x256xf32>
    %75 = vector.broadcast %1 : vector<32x1xf32> to vector<32x256xf32>
    %76 = arith.addf %74, %75 : vector<32x256xf32>
    %cst_20 = arith.constant 0.000000e+00 : f32
    %77 = vector.broadcast %cst_20 : f32 to vector<32x256xf32>
    %78 = arith.maximumf %76, %77 : vector<32x256xf32>
    %c0_21 = arith.constant 0 : index
    %c512 = arith.constant 512 : index
    %79 = vector.load %arg7[%c0_21, %c512] : memref<32x2048xf32, #tpu.memory_space<vmem>>, vector<32x256xf32>
    tpu.vector_store %arg7[%c0_21, %c512], %78 {strides = array<i32>} : memref<32x2048xf32, #tpu.memory_space<vmem>>, vector<32x256xf32>,
    %c0_22 = arith.constant 0 : index
    %c3 = arith.constant 3 : index
    %c0_23 = arith.constant 0 : index
    %c0_24 = arith.constant 0 : index
    %80 = vector.load %arg1[%c0_22, %c3, %c0_23, %c0_24] : memref<2x4x3x256xf32, #tpu.memory_space<vmem>>, vector<1x1x3x256xf32>
    %81 = vector.shape_cast %80 : vector<1x1x3x256xf32> to vector<3x256xf32>
    %cst_25 = arith.constant 0.000000e+00 : f32
    %82 = vector.broadcast %cst_25 : f32 to vector<32x256xf32>
    %83 = vector.extract_strided_slice %0 {offsets = [0, 0], sizes = [32, 1], strides = [1, 1]} : vector<32x3xf32> to vector<32x1xf32>
    %84 = vector.extract_strided_slice %81 {offsets = [0, 0], sizes = [1, 256], strides = [1, 1]} : vector<3x256xf32> to vector<1x256xf32>
    %85 = vector.broadcast %83 : vector<32x1xf32> to vector<32x256xf32>
    %86 = vector.broadcast %84 : vector<1x256xf32> to vector<32x256xf32>
    %87 = arith.mulf %85, %86 : vector<32x256xf32>
    %88 = arith.addf %82, %87 : vector<32x256xf32>
    %89 = vector.extract_strided_slice %0 {offsets = [0, 1], sizes = [32, 1], strides = [1, 1]} : vector<32x3xf32> to vector<32x1xf32>
    %90 = vector.extract_strided_slice %81 {offsets = [1, 0], sizes = [1, 256], strides = [1, 1]} : vector<3x256xf32> to vector<1x256xf32>
    %91 = vector.broadcast %89 : vector<32x1xf32> to vector<32x256xf32>
    %92 = vector.broadcast %90 : vector<1x256xf32> to vector<32x256xf32>
    %93 = arith.mulf %91, %92 : vector<32x256xf32>
    %94 = arith.addf %88, %93 : vector<32x256xf32>
    %95 = vector.extract_strided_slice %0 {offsets = [0, 2], sizes = [32, 1], strides = [1, 1]} : vector<32x3xf32> to vector<32x1xf32>
    %96 = vector.extract_strided_slice %81 {offsets = [2, 0], sizes = [1, 256], strides = [1, 1]} : vector<3x256xf32> to vector<1x256xf32>
    %97 = vector.broadcast %95 : vector<32x1xf32> to vector<32x256xf32>
    %98 = vector.broadcast %96 : vector<1x256xf32> to vector<32x256xf32>
    %99 = arith.mulf %97, %98 : vector<32x256xf32>
    %100 = arith.addf %94, %99 : vector<32x256xf32>
    %101 = vector.broadcast %1 : vector<32x1xf32> to vector<32x256xf32>
    %102 = arith.addf %100, %101 : vector<32x256xf32>
    %cst_26 = arith.constant 0.000000e+00 : f32
    %103 = vector.broadcast %cst_26 : f32 to vector<32x256xf32>
    %104 = arith.maximumf %102, %103 : vector<32x256xf32>
    %c0_27 = arith.constant 0 : index
    %c768 = arith.constant 768 : index
    %105 = vector.load %arg7[%c0_27, %c768] : memref<32x2048xf32, #tpu.memory_space<vmem>>, vector<32x256xf32>
    tpu.vector_store %arg7[%c0_27, %c768], %104 {strides = array<i32>} : memref<32x2048xf32, #tpu.memory_space<vmem>>, vector<32x256xf32>,
    %c1_28 = arith.constant 1 : index
    %c0_29 = arith.constant 0 : index
    %c0_30 = arith.constant 0 : index
    %c0_31 = arith.constant 0 : index
    %106 = vector.load %arg1[%c1_28, %c0_29, %c0_30, %c0_31] : memref<2x4x3x256xf32, #tpu.memory_space<vmem>>, vector<1x1x3x256xf32>
    %107 = vector.shape_cast %106 : vector<1x1x3x256xf32> to vector<3x256xf32>
    %cst_32 = arith.constant 0.000000e+00 : f32
    %108 = vector.broadcast %cst_32 : f32 to vector<32x256xf32>
    %109 = vector.extract_strided_slice %0 {offsets = [0, 0], sizes = [32, 1], strides = [1, 1]} : vector<32x3xf32> to vector<32x1xf32>
    %110 = vector.extract_strided_slice %107 {offsets = [0, 0], sizes = [1, 256], strides = [1, 1]} : vector<3x256xf32> to vector<1x256xf32>
    %111 = vector.broadcast %109 : vector<32x1xf32> to vector<32x256xf32>
    %112 = vector.broadcast %110 : vector<1x256xf32> to vector<32x256xf32>
    %113 = arith.mulf %111, %112 : vector<32x256xf32>
    %114 = arith.addf %108, %113 : vector<32x256xf32>
    %115 = vector.extract_strided_slice %0 {offsets = [0, 1], sizes = [32, 1], strides = [1, 1]} : vector<32x3xf32> to vector<32x1xf32>
    %116 = vector.extract_strided_slice %107 {offsets = [1, 0], sizes = [1, 256], strides = [1, 1]} : vector<3x256xf32> to vector<1x256xf32>
    %117 = vector.broadcast %115 : vector<32x1xf32> to vector<32x256xf32>
    %118 = vector.broadcast %116 : vector<1x256xf32> to vector<32x256xf32>
    %119 = arith.mulf %117, %118 : vector<32x256xf32>
    %120 = arith.addf %114, %119 : vector<32x256xf32>
    %121 = vector.extract_strided_slice %0 {offsets = [0, 2], sizes = [32, 1], strides = [1, 1]} : vector<32x3xf32> to vector<32x1xf32>
    %122 = vector.extract_strided_slice %107 {offsets = [2, 0], sizes = [1, 256], strides = [1, 1]} : vector<3x256xf32> to vector<1x256xf32>
    %123 = vector.broadcast %121 : vector<32x1xf32> to vector<32x256xf32>
    %124 = vector.broadcast %122 : vector<1x256xf32> to vector<32x256xf32>
    %125 = arith.mulf %123, %124 : vector<32x256xf32>
    %126 = arith.addf %120, %125 : vector<32x256xf32>
    %127 = vector.broadcast %1 : vector<32x1xf32> to vector<32x256xf32>
    %128 = arith.addf %126, %127 : vector<32x256xf32>
    %cst_33 = arith.constant 0.000000e+00 : f32
    %129 = vector.broadcast %cst_33 : f32 to vector<32x256xf32>
    %130 = arith.maximumf %128, %129 : vector<32x256xf32>
    %c0_34 = arith.constant 0 : index
    %c1024 = arith.constant 1024 : index
    %131 = vector.load %arg7[%c0_34, %c1024] : memref<32x2048xf32, #tpu.memory_space<vmem>>, vector<32x256xf32>
    tpu.vector_store %arg7[%c0_34, %c1024], %130 {strides = array<i32>} : memref<32x2048xf32, #tpu.memory_space<vmem>>, vector<32x256xf32>,
    %c1_35 = arith.constant 1 : index
    %c1_36 = arith.constant 1 : index
    %c0_37 = arith.constant 0 : index
    %c0_38 = arith.constant 0 : index
    %132 = vector.load %arg1[%c1_35, %c1_36, %c0_37, %c0_38] : memref<2x4x3x256xf32, #tpu.memory_space<vmem>>, vector<1x1x3x256xf32>
    %133 = vector.shape_cast %132 : vector<1x1x3x256xf32> to vector<3x256xf32>
    %cst_39 = arith.constant 0.000000e+00 : f32
    %134 = vector.broadcast %cst_39 : f32 to vector<32x256xf32>
    %135 = vector.extract_strided_slice %0 {offsets = [0, 0], sizes = [32, 1], strides = [1, 1]} : vector<32x3xf32> to vector<32x1xf32>
    %136 = vector.extract_strided_slice %133 {offsets = [0, 0], sizes = [1, 256], strides = [1, 1]} : vector<3x256xf32> to vector<1x256xf32>
    %137 = vector.broadcast %135 : vector<32x1xf32> to vector<32x256xf32>
    %138 = vector.broadcast %136 : vector<1x256xf32> to vector<32x256xf32>
    %139 = arith.mulf %137, %138 : vector<32x256xf32>
    %140 = arith.addf %134, %139 : vector<32x256xf32>
    %141 = vector.extract_strided_slice %0 {offsets = [0, 1], sizes = [32, 1], strides = [1, 1]} : vector<32x3xf32> to vector<32x1xf32>
    %142 = vector.extract_strided_slice %133 {offsets = [1, 0], sizes = [1, 256], strides = [1, 1]} : vector<3x256xf32> to vector<1x256xf32>
    %143 = vector.broadcast %141 : vector<32x1xf32> to vector<32x256xf32>
    %144 = vector.broadcast %142 : vector<1x256xf32> to vector<32x256xf32>
    %145 = arith.mulf %143, %144 : vector<32x256xf32>
    %146 = arith.addf %140, %145 : vector<32x256xf32>
    %147 = vector.extract_strided_slice %0 {offsets = [0, 2], sizes = [32, 1], strides = [1, 1]} : vector<32x3xf32> to vector<32x1xf32>
    %148 = vector.extract_strided_slice %133 {offsets = [2, 0], sizes = [1, 256], strides = [1, 1]} : vector<3x256xf32> to vector<1x256xf32>
    %149 = vector.broadcast %147 : vector<32x1xf32> to vector<32x256xf32>
    %150 = vector.broadcast %148 : vector<1x256xf32> to vector<32x256xf32>
    %151 = arith.mulf %149, %150 : vector<32x256xf32>
    %152 = arith.addf %146, %151 : vector<32x256xf32>
    %153 = vector.broadcast %1 : vector<32x1xf32> to vector<32x256xf32>
    %154 = arith.addf %152, %153 : vector<32x256xf32>
    %cst_40 = arith.constant 0.000000e+00 : f32
    %155 = vector.broadcast %cst_40 : f32 to vector<32x256xf32>
    %156 = arith.maximumf %154, %155 : vector<32x256xf32>
    %c0_41 = arith.constant 0 : index
    %c1280 = arith.constant 1280 : index
    %157 = vector.load %arg7[%c0_41, %c1280] : memref<32x2048xf32, #tpu.memory_space<vmem>>, vector<32x256xf32>
    tpu.vector_store %arg7[%c0_41, %c1280], %156 {strides = array<i32>} : memref<32x2048xf32, #tpu.memory_space<vmem>>, vector<32x256xf32>,
    %c1_42 = arith.constant 1 : index
    %c2_43 = arith.constant 2 : index
    %c0_44 = arith.constant 0 : index
    %c0_45 = arith.constant 0 : index
    %158 = vector.load %arg1[%c1_42, %c2_43, %c0_44, %c0_45] : memref<2x4x3x256xf32, #tpu.memory_space<vmem>>, vector<1x1x3x256xf32>
    %159 = vector.shape_cast %158 : vector<1x1x3x256xf32> to vector<3x256xf32>
    %cst_46 = arith.constant 0.000000e+00 : f32
    %160 = vector.broadcast %cst_46 : f32 to vector<32x256xf32>
    %161 = vector.extract_strided_slice %0 {offsets = [0, 0], sizes = [32, 1], strides = [1, 1]} : vector<32x3xf32> to vector<32x1xf32>
    %162 = vector.extract_strided_slice %159 {offsets = [0, 0], sizes = [1, 256], strides = [1, 1]} : vector<3x256xf32> to vector<1x256xf32>
    %163 = vector.broadcast %161 : vector<32x1xf32> to vector<32x256xf32>
    %164 = vector.broadcast %162 : vector<1x256xf32> to vector<32x256xf32>
    %165 = arith.mulf %163, %164 : vector<32x256xf32>
    %166 = arith.addf %160, %165 : vector<32x256xf32>
    %167 = vector.extract_strided_slice %0 {offsets = [0, 1], sizes = [32, 1], strides = [1, 1]} : vector<32x3xf32> to vector<32x1xf32>
    %168 = vector.extract_strided_slice %159 {offsets = [1, 0], sizes = [1, 256], strides = [1, 1]} : vector<3x256xf32> to vector<1x256xf32>
    %169 = vector.broadcast %167 : vector<32x1xf32> to vector<32x256xf32>
    %170 = vector.broadcast %168 : vector<1x256xf32> to vector<32x256xf32>
    %171 = arith.mulf %169, %170 : vector<32x256xf32>
    %172 = arith.addf %166, %171 : vector<32x256xf32>
    %173 = vector.extract_strided_slice %0 {offsets = [0, 2], sizes = [32, 1], strides = [1, 1]} : vector<32x3xf32> to vector<32x1xf32>
    %174 = vector.extract_strided_slice %159 {offsets = [2, 0], sizes = [1, 256], strides = [1, 1]} : vector<3x256xf32> to vector<1x256xf32>
    %175 = vector.broadcast %173 : vector<32x1xf32> to vector<32x256xf32>
    %176 = vector.broadcast %174 : vector<1x256xf32> to vector<32x256xf32>
    %177 = arith.mulf %175, %176 : vector<32x256xf32>
    %178 = arith.addf %172, %177 : vector<32x256xf32>
    %179 = vector.broadcast %1 : vector<32x1xf32> to vector<32x256xf32>
    %180 = arith.addf %178, %179 : vector<32x256xf32>
    %cst_47 = arith.constant 0.000000e+00 : f32
    %181 = vector.broadcast %cst_47 : f32 to vector<32x256xf32>
    %182 = arith.maximumf %180, %181 : vector<32x256xf32>
    %c0_48 = arith.constant 0 : index
    %c1536 = arith.constant 1536 : index
    %183 = vector.load %arg7[%c0_48, %c1536] : memref<32x2048xf32, #tpu.memory_space<vmem>>, vector<32x256xf32>
    tpu.vector_store %arg7[%c0_48, %c1536], %182 {strides = array<i32>} : memref<32x2048xf32, #tpu.memory_space<vmem>>, vector<32x256xf32>,
    %c1_49 = arith.constant 1 : index
    %c3_50 = arith.constant 3 : index
    %c0_51 = arith.constant 0 : index
    %c0_52 = arith.constant 0 : index
    %184 = vector.load %arg1[%c1_49, %c3_50, %c0_51, %c0_52] : memref<2x4x3x256xf32, #tpu.memory_space<vmem>>, vector<1x1x3x256xf32>
    %185 = vector.shape_cast %184 : vector<1x1x3x256xf32> to vector<3x256xf32>
    %cst_53 = arith.constant 0.000000e+00 : f32
    %186 = vector.broadcast %cst_53 : f32 to vector<32x256xf32>
    %187 = vector.extract_strided_slice %0 {offsets = [0, 0], sizes = [32, 1], strides = [1, 1]} : vector<32x3xf32> to vector<32x1xf32>
    %188 = vector.extract_strided_slice %185 {offsets = [0, 0], sizes = [1, 256], strides = [1, 1]} : vector<3x256xf32> to vector<1x256xf32>
    %189 = vector.broadcast %187 : vector<32x1xf32> to vector<32x256xf32>
    %190 = vector.broadcast %188 : vector<1x256xf32> to vector<32x256xf32>
    %191 = arith.mulf %189, %190 : vector<32x256xf32>
    %192 = arith.addf %186, %191 : vector<32x256xf32>
    %193 = vector.extract_strided_slice %0 {offsets = [0, 1], sizes = [32, 1], strides = [1, 1]} : vector<32x3xf32> to vector<32x1xf32>
    %194 = vector.extract_strided_slice %185 {offsets = [1, 0], sizes = [1, 256], strides = [1, 1]} : vector<3x256xf32> to vector<1x256xf32>
    %195 = vector.broadcast %193 : vector<32x1xf32> to vector<32x256xf32>
    %196 = vector.broadcast %194 : vector<1x256xf32> to vector<32x256xf32>
    %197 = arith.mulf %195, %196 : vector<32x256xf32>
    %198 = arith.addf %192, %197 : vector<32x256xf32>
    %199 = vector.extract_strided_slice %0 {offsets = [0, 2], sizes = [32, 1], strides = [1, 1]} : vector<32x3xf32> to vector<32x1xf32>
    %200 = vector.extract_strided_slice %185 {offsets = [2, 0], sizes = [1, 256], strides = [1, 1]} : vector<3x256xf32> to vector<1x256xf32>
    %201 = vector.broadcast %199 : vector<32x1xf32> to vector<32x256xf32>
    %202 = vector.broadcast %200 : vector<1x256xf32> to vector<32x256xf32>
    %203 = arith.mulf %201, %202 : vector<32x256xf32>
    %204 = arith.addf %198, %203 : vector<32x256xf32>
    %205 = vector.broadcast %1 : vector<32x1xf32> to vector<32x256xf32>
    %206 = arith.addf %204, %205 : vector<32x256xf32>
    %cst_54 = arith.constant 0.000000e+00 : f32
    %207 = vector.broadcast %cst_54 : f32 to vector<32x256xf32>
    %208 = arith.maximumf %206, %207 : vector<32x256xf32>
    %c0_55 = arith.constant 0 : index
    %c1792 = arith.constant 1792 : index
    %209 = vector.load %arg7[%c0_55, %c1792] : memref<32x2048xf32, #tpu.memory_space<vmem>>, vector<32x256xf32>
    tpu.vector_store %arg7[%c0_55, %c1792], %208 {strides = array<i32>} : memref<32x2048xf32, #tpu.memory_space<vmem>>, vector<32x256xf32>,
    %cst_56 = arith.constant 0.000000e+00 : f32
    %210 = vector.broadcast %cst_56 : f32 to vector<4x256xf32>
    %c8 = arith.constant 8 : index
    %c0_57 = arith.constant 0 : index
    %211 = vector.load %arg7[%c8, %c0_57] : memref<32x2048xf32, #tpu.memory_space<vmem>>, vector<24x2048xf32>
    %c8_58 = arith.constant 8 : index
    %c0_59 = arith.constant 0 : index
    %212 = vector.load %arg8[%c8_58, %c0_59] : memref<32x2048xf32, #tpu.memory_space<vmem>>, vector<24x2048xf32>
    tpu.vector_store %arg8[%c8_58, %c0_59], %211 {strides = array<i32>} : memref<32x2048xf32, #tpu.memory_space<vmem>>, vector<24x2048xf32>,
    %c0_60 = arith.constant 0 : index
    %c256_61 = arith.constant 256 : index
    %213 = vector.load %arg7[%c0_60, %c256_61] : memref<32x2048xf32, #tpu.memory_space<vmem>>, vector<4x768xf32>
    %c0_62 = arith.constant 0 : index
    %c0_63 = arith.constant 0 : index
    %214 = vector.load %arg8[%c0_62, %c0_63] : memref<32x2048xf32, #tpu.memory_space<vmem>>, vector<4x768xf32>
    tpu.vector_store %arg8[%c0_62, %c0_63], %213 {strides = array<i32>} : memref<32x2048xf32, #tpu.memory_space<vmem>>, vector<4x768xf32>,
    %c0_64 = arith.constant 0 : index
    %c768_65 = arith.constant 768 : index
    %215 = vector.load %arg8[%c0_64, %c768_65] : memref<32x2048xf32, #tpu.memory_space<vmem>>, vector<4x256xf32>
    tpu.vector_store %arg8[%c0_64, %c768_65], %210 {strides = array<i32>} : memref<32x2048xf32, #tpu.memory_space<vmem>>, vector<4x256xf32>,
    %c4 = arith.constant 4 : index
    %c0_66 = arith.constant 0 : index
    %216 = vector.load %arg7[%c4, %c0_66] : memref<32x2048xf32, #tpu.memory_space<vmem>>, vector<4x768xf32>
    %c4_67 = arith.constant 4 : index
    %c256_68 = arith.constant 256 : index
    %217 = vector.load %arg8[%c4_67, %c256_68] : memref<32x2048xf32, #tpu.memory_space<vmem>>, vector<4x768xf32>
    tpu.vector_store %arg8[%c4_67, %c256_68], %216 {strides = array<i32>} : memref<32x2048xf32, #tpu.memory_space<vmem>>, vector<4x768xf32>,
    %c4_69 = arith.constant 4 : index
    %c0_70 = arith.constant 0 : index
    %218 = vector.load %arg8[%c4_69, %c0_70] : memref<32x2048xf32, #tpu.memory_space<vmem>>, vector<4x256xf32>
    tpu.vector_store %arg8[%c4_69, %c0_70], %210 {strides = array<i32>} : memref<32x2048xf32, #tpu.memory_space<vmem>>, vector<4x256xf32>,
    %c0_71 = arith.constant 0 : index
    %c1280_72 = arith.constant 1280 : index
    %219 = vector.load %arg7[%c0_71, %c1280_72] : memref<32x2048xf32, #tpu.memory_space<vmem>>, vector<4x768xf32>
    %c0_73 = arith.constant 0 : index
    %c1024_74 = arith.constant 1024 : index
    %220 = vector.load %arg8[%c0_73, %c1024_74] : memref<32x2048xf32, #tpu.memory_space<vmem>>, vector<4x768xf32>
    tpu.vector_store %arg8[%c0_73, %c1024_74], %219 {strides = array<i32>} : memref<32x2048xf32, #tpu.memory_space<vmem>>, vector<4x768xf32>,
    %c0_75 = arith.constant 0 : index
    %c1792_76 = arith.constant 1792 : index
    %221 = vector.load %arg8[%c0_75, %c1792_76] : memref<32x2048xf32, #tpu.memory_space<vmem>>, vector<4x256xf32>
    tpu.vector_store %arg8[%c0_75, %c1792_76], %210 {strides = array<i32>} : memref<32x2048xf32, #tpu.memory_space<vmem>>, vector<4x256xf32>,
    %c4_77 = arith.constant 4 : index
    %c1024_78 = arith.constant 1024 : index
    %222 = vector.load %arg7[%c4_77, %c1024_78] : memref<32x2048xf32, #tpu.memory_space<vmem>>, vector<4x768xf32>
    %c4_79 = arith.constant 4 : index
    %c1280_80 = arith.constant 1280 : index
    %223 = vector.load %arg8[%c4_79, %c1280_80] : memref<32x2048xf32, #tpu.memory_space<vmem>>, vector<4x768xf32>
    tpu.vector_store %arg8[%c4_79, %c1280_80], %222 {strides = array<i32>} : memref<32x2048xf32, #tpu.memory_space<vmem>>, vector<4x768xf32>,
    %c4_81 = arith.constant 4 : index
    %c1024_82 = arith.constant 1024 : index
    %224 = vector.load %arg8[%c4_81, %c1024_82] : memref<32x2048xf32, #tpu.memory_space<vmem>>, vector<4x256xf32>
    tpu.vector_store %arg8[%c4_81, %c1024_82], %210 {strides = array<i32>} : memref<32x2048xf32, #tpu.memory_space<vmem>>, vector<4x256xf32>,
    %c0_83 = arith.constant 0 : index
    %c0_84 = arith.constant 0 : index
    %225 = vector.load %arg4[%c0_83, %c0_84] : memref<32x32xf32, #tpu.memory_space<vmem>>, vector<32x32xf32>
    %c0_85 = arith.constant 0 : index
    %c0_86 = arith.constant 0 : index
    %226 = vector.load %arg8[%c0_85, %c0_86] : memref<32x2048xf32, #tpu.memory_space<vmem>>, vector<32x2048xf32>
    %cst_87 = arith.constant dense<0.000000e+00> : vector<32x2048xf32>
    %227 = tpu.matmul %225, %226, %cst_87 {dimension_numbers = #tpu.dot_dimension_numbers<[1], [0], [0], [1], [0, 0, 1, 1], [], []>} : vector<32x32xf32>, vector<32x2048xf32>, vector<32x2048xf32> -> vector<32x2048xf32>
    %c0_88 = arith.constant 0 : index
    %c0_89 = arith.constant 0 : index
    %228 = vector.load %arg5[%c0_88, %c0_89] : memref<32x1xf32, #tpu.memory_space<vmem>>, vector<32x1xf32>
    %229 = vector.extract_strided_slice %227 {offsets = [0, 0], sizes = [32, 1024], strides = [1, 1]} : vector<32x2048xf32> to vector<32x1024xf32>
    %230 = vector.broadcast %228 : vector<32x1xf32> to vector<32x1024xf32>
    %231 = arith.addf %229, %230 : vector<32x1024xf32>
    %c0_90 = arith.constant 0 : index
    %c0_91 = arith.constant 0 : index
    %232 = vector.load %arg7[%c0_90, %c0_91] : memref<32x2048xf32, #tpu.memory_space<vmem>>, vector<32x1024xf32>
    %233 = arith.addf %231, %232 : vector<32x1024xf32>
    %cst_92 = arith.constant 0.000000e+00 : f32
    %234 = vector.broadcast %cst_92 : f32 to vector<32x1024xf32>
    %235 = arith.maximumf %233, %234 : vector<32x1024xf32>
    %cst_93 = arith.constant dense<0.000000e+00> : vector<32xf32>
    %236 = vector.multi_reduction <add>, %235, %cst_93 [1] : vector<32x1024xf32> to vector<32xf32>
    %cst_94 = arith.constant 9.765625E-4 : f32
    %237 = vector.broadcast %cst_94 : f32 to vector<32xf32>
    %238 = arith.mulf %236, %237 : vector<32xf32>
    %239 = vector.shape_cast %238 : vector<32xf32> to vector<1x32xf32>
    %c0_95 = arith.constant 0 : index
    %c0_96 = arith.constant 0 : index
    %c0_97 = arith.constant 0 : index
    %240 = vector.load %arg6[%c0_95, %c0_96, %c0_97] : memref<2x1x32xf32, #tpu.memory_space<vmem>>, vector<1x1x32xf32>
    %241 = vector.shape_cast %240 : vector<1x1x32xf32> to vector<1x32xf32>
    %242 = vector.shape_cast %239 : vector<1x32xf32> to vector<1x1x32xf32>
    tpu.vector_store %arg6[%c0_95, %c0_96, %c0_97], %242 {strides = array<i32>} : memref<2x1x32xf32, #tpu.memory_space<vmem>>, vector<1x1x32xf32>,
    %243 = vector.extract_strided_slice %227 {offsets = [0, 1024], sizes = [32, 1024], strides = [1, 1]} : vector<32x2048xf32> to vector<32x1024xf32>
    %244 = vector.broadcast %228 : vector<32x1xf32> to vector<32x1024xf32>
    %245 = arith.addf %243, %244 : vector<32x1024xf32>
    %c0_98 = arith.constant 0 : index
    %c1024_99 = arith.constant 1024 : index
    %246 = vector.load %arg7[%c0_98, %c1024_99] : memref<32x2048xf32, #tpu.memory_space<vmem>>, vector<32x1024xf32>
    %247 = arith.addf %245, %246 : vector<32x1024xf32>
    %cst_100 = arith.constant 0.000000e+00 : f32
    %248 = vector.broadcast %cst_100 : f32 to vector<32x1024xf32>
    %249 = arith.maximumf %247, %248 : vector<32x1024xf32>
    %cst_101 = arith.constant dense<0.000000e+00> : vector<32xf32>
    %250 = vector.multi_reduction <add>, %249, %cst_101 [1] : vector<32x1024xf32> to vector<32xf32>
    %cst_102 = arith.constant 9.765625E-4 : f32
    %251 = vector.broadcast %cst_102 : f32 to vector<32xf32>
    %252 = arith.mulf %250, %251 : vector<32xf32>
    %253 = vector.shape_cast %252 : vector<32xf32> to vector<1x32xf32>
    %c1_103 = arith.constant 1 : index
    %c0_104 = arith.constant 0 : index
    %c0_105 = arith.constant 0 : index
    %254 = vector.load %arg6[%c1_103, %c0_104, %c0_105] : memref<2x1x32xf32, #tpu.memory_space<vmem>>, vector<1x1x32xf32>
    %255 = vector.shape_cast %254 : vector<1x1x32xf32> to vector<1x32xf32>
    %256 = vector.shape_cast %253 : vector<1x32xf32> to vector<1x1x32xf32>
    tpu.vector_store %arg6[%c1_103, %c0_104, %c0_105], %256 {strides = array<i32>} : memref<2x1x32xf32, #tpu.memory_space<vmem>>, vector<1x1x32xf32>,
    return
  }
  func.func @transform_0(%arg0: i32) -> (i32, i32, i32, i32) {
    %c0_i32 = arith.constant 0 : i32
    %c0_i32_0 = arith.constant 0 : i32
    %c0_i32_1 = arith.constant 0 : i32
    %c0_i32_2 = arith.constant 0 : i32
    return %arg0, %c0_i32, %c0_i32_0, %c0_i32_1 : i32, i32, i32, i32
  }
  func.func @transform_1(%arg0: i32) -> (i32, i32) {
    %c0_i32 = arith.constant 0 : i32
    %c0_i32_0 = arith.constant 0 : i32
    %c0_i32_1 = arith.constant 0 : i32
    return %c0_i32, %c0_i32_0 : i32, i32
  }
  func.func @transform_2(%arg0: i32) -> (i32, i32) {
    %c0_i32 = arith.constant 0 : i32
    %c0_i32_0 = arith.constant 0 : i32
    %c0_i32_1 = arith.constant 0 : i32
    return %c0_i32, %c0_i32_0 : i32, i32
  }
  func.func @transform_3(%arg0: i32) -> (i32, i32) {
    %c0_i32 = arith.constant 0 : i32
    %c0_i32_0 = arith.constant 0 : i32
    %c0_i32_1 = arith.constant 0 : i32
    return %c0_i32, %c0_i32_0 : i32, i32
  }
  func.func @transform_4(%arg0: i32) -> (i32, i32) {
    %c0_i32 = arith.constant 0 : i32
    %c0_i32_0 = arith.constant 0 : i32
    %c0_i32_1 = arith.constant 0 : i32
    return %c0_i32, %c0_i32_0 : i32, i32
  }
  func.func @transform_5(%arg0: i32) -> (i32, i32, i32) {
    %c0_i32 = arith.constant 0 : i32
    %c0_i32_0 = arith.constant 0 : i32
    %c0_i32_1 = arith.constant 0 : i32
    return %arg0, %c0_i32, %c0_i32_0 : i32, i32, i32
  }
}

</mosaic_0001>

<llo_original>
// kernel: tsn_forward.1
$region0: #{tsn_forward.1}
  #allocation0 [shape = 'u32[]', space=smem, size = 0x4, offset = 0x4, fixed_abs, tag = 'smem constant byte address 0x4 - core index']
  #allocation1 [shape = 'u32[144,128]{1,0:T(1,128)}', space=vmem, size = 0x12000, scoped, tag = 'internal scratch']
  #allocation2 [shape = 'f32[32,2048]{1,0:T(8,128)}', space=vmem, size = 0x40000, scoped, tag = 'scratch operand']
  #allocation3 [shape = 'f32[32,2048]{1,0:T(8,128)}', space=vmem, size = 0x40000, scoped, tag = 'scratch operand']
  %s0 = inlined_call_operand.vmem [shape: f32[2,4,3,256], index: 0, kind: input, shape index: {}]
  %s1 = inlined_call_operand.vmem [shape: f32[32,3], index: 1, kind: input, shape index: {}]
  %s2 = inlined_call_operand.vmem [shape: f32[32,1], index: 2, kind: input, shape index: {}]
  %s3 = inlined_call_operand.vmem [shape: f32[32,32], index: 3, kind: input, shape index: {}]
  %s4 = inlined_call_operand.vmem [shape: f32[32,1], index: 4, kind: input, shape index: {}]
  %s5 = inlined_call_operand.vmem [shape: f32[2,1,32], index: 5, kind: output, shape index: {}]
  %s6 = sld [smem:[#allocation0]]
  $region30: #{tsn_forward.1} parent=0
    _
  %s8 = ssub.s32 1, %s6
  %s9 = scalar_select 0, %s8, %s6
  // Predicated region
  $region2: #{tsn_forward.1} parent=0 // pred_check
    _
  $region3: #{tsn_forward.1} parent=0 // pred_check_branch
    %11 = sbr.rel (0) target = $region5
  $region4: #{tsn_forward.1} parent=0 // pred_region
    _
  $region5: #{tsn_forward.1} parent=0 // pred_fallthru
    _
  // Predicated region
  $region6: #{tsn_forward.1} parent=0 // pred_check
    _
  $region7: #{tsn_forward.1} parent=0 // pred_check_branch
    %13 = sbr.rel (0) target = $region9
  $region8: #{tsn_forward.1} parent=0 // pred_region
    _
  $region9: #{tsn_forward.1} parent=0 // pred_fallthru
    _
  // Predicated region
  $region10: #{tsn_forward.1} parent=0 // pred_check
    _
  $region11: #{tsn_forward.1} parent=0 // pred_check_branch
    %15 = sbr.rel (0) target = $region13
  $region12: #{tsn_forward.1} parent=0 // pred_region
    _
  $region13: #{tsn_forward.1} parent=0 // pred_fallthru
    _
  // Predicated region
  $region14: #{tsn_forward.1} parent=0 // pred_check
    _
  $region15: #{tsn_forward.1} parent=0 // pred_check_branch
    %17 = sbr.rel (0) target = $region17
  $region16: #{tsn_forward.1} parent=0 // pred_region
    _
  $region17: #{tsn_forward.1} parent=0 // pred_fallthru
    _
  // Predicated region
  $region18: #{tsn_forward.1} parent=0 // pred_check
    _
  $region19: #{tsn_forward.1} parent=0 // pred_check_branch
    %19 = sbr.rel (0) target = $region21
  $region20: #{tsn_forward.1} parent=0 // pred_region
    _
  $region21: #{tsn_forward.1} parent=0 // pred_fallthru
    _
  %v20 = vld [vmem:[%s1] sm:$0xff]
  %v21 = vld [vmem:[%s1 + $0x8] sm:$0xff]
  %v22 = vld [vmem:[%s1 + $0x10] sm:$0xff]
  %v23 = vld [vmem:[%s1 + $0x18] sm:$0xff]
  %v24 = vld [vmem:[%s2] sm:$0xff]
  %v25 = vld [vmem:[%s2 + $0x8] sm:$0xff]
  %v26 = vld [vmem:[%s2 + $0x10] sm:$0xff]
  %v27 = vld [vmem:[%s2 + $0x18] sm:$0xff]
  %v28 = vld [vmem:[%s0] sm:$0x77]
  %30 = vset.pattern.permute.xlu0 0
  %31 = vperm.xlu0 %30, %v20
  %v32 = vpop.permute.xlu0 %31
  %35 = vset.pattern.permute.xlu0 0
  %36 = vperm.xlu0 %35, %v21
  %v37 = vpop.permute.xlu0 %36
  %40 = vset.pattern.permute.xlu0 0
  %41 = vperm.xlu0 %40, %v22
  %v42 = vpop.permute.xlu0 %41
  %45 = vset.pattern.permute.xlu0 0
  %46 = vperm.xlu0 %45, %v23
  %v47 = vpop.permute.xlu0 %46
  %v50 = vlaneseq
  %v51 = vshrl.u32 %v50, 7
  %v52 = vsub.s32 0, %v51
  %v53 = vrot.slane %v28, %v52
  %v54 = vlaneseq
  %v55 = vshrl.u32 %v54, 7
  %v56 = vsub.s32 4, %v55
  %v57 = vrot.slane %v28, %v56
  %v60 = vlaneseq
  %v61 = vshrl.u32 %v60, 7
  %v62 = vsub.s32 0, %v61
  %v63 = vrot.slane %v53, %v62
  %v64 = vlaneseq
  %v65 = vshrl.u32 %v64, 7
  %v66 = vsub.s32 0, %v65
  %v67 = vrot.slane %v57, %v66
  %v68 = vmul.f32 %v32, %v63
  %v69 = vmul.f32 %v32, %v67
  %v70 = vmul.f32 %v37, %v63
  %v71 = vmul.f32 %v37, %v67
  %v72 = vmul.f32 %v42, %v63
  %v73 = vmul.f32 %v42, %v67
  %v74 = vmul.f32 %v47, %v63
  %v75 = vmul.f32 %v47, %v67
  %v76 = vadd.f32 %v68, 0.0
  %v77 = vadd.f32 %v69, 0.0
  %v78 = vadd.f32 %v70, 0.0
  %v79 = vadd.f32 %v71, 0.0
  %v80 = vadd.f32 %v72, 0.0
  %v81 = vadd.f32 %v73, 0.0
  %v82 = vadd.f32 %v74, 0.0
  %v83 = vadd.f32 %v75, 0.0
  %84 = vset.pattern.permute.xlu0 1
  %85 = vperm.xlu0 %84, %v20
  %v86 = vpop.permute.xlu0 %85
  %88 = vset.pattern.permute.xlu0 1
  %89 = vperm.xlu0 %88, %v21
  %v90 = vpop.permute.xlu0 %89
  %92 = vset.pattern.permute.xlu0 1
  %93 = vperm.xlu0 %92, %v22
  %v94 = vpop.permute.xlu0 %93
  %96 = vset.pattern.permute.xlu0 1
  %97 = vperm.xlu0 %96, %v23
  %v98 = vpop.permute.xlu0 %97
  %v100 = vlaneseq
  %v101 = vshrl.u32 %v100, 7
  %v102 = vsub.s32 1, %v101
  %v103 = vrot.slane %v28, %v102
  %v104 = vlaneseq
  %v105 = vshrl.u32 %v104, 7
  %v106 = vsub.s32 5, %v105
  %v107 = vrot.slane %v28, %v106
  %v110 = vlaneseq
  %v111 = vshrl.u32 %v110, 7
  %v112 = vsub.s32 1, %v111
  %v113 = vrot.slane %v103, %v112
  %v114 = vlaneseq
  %v115 = vshrl.u32 %v114, 7
  %v116 = vsub.s32 1, %v115
  %v117 = vrot.slane %v107, %v116
  %v118 = vmul.f32 %v86, %v113
  %v119 = vmul.f32 %v86, %v117
  %v120 = vmul.f32 %v90, %v113
  %v121 = vmul.f32 %v90, %v117
  %v122 = vmul.f32 %v94, %v113
  %v123 = vmul.f32 %v94, %v117
  %v124 = vmul.f32 %v98, %v113
  %v125 = vmul.f32 %v98, %v117
  %v126 = vadd.f32 %v76, %v118
  %v127 = vadd.f32 %v77, %v119
  %v128 = vadd.f32 %v78, %v120
  %v129 = vadd.f32 %v79, %v121
  %v130 = vadd.f32 %v80, %v122
  %v131 = vadd.f32 %v81, %v123
  %v132 = vadd.f32 %v82, %v124
  %v133 = vadd.f32 %v83, %v125
  %134 = vset.pattern.permute.xlu0 2
  %135 = vperm.xlu0 %134, %v20
  %v136 = vpop.permute.xlu0 %135
  %138 = vset.pattern.permute.xlu0 2
  %139 = vperm.xlu0 %138, %v21
  %v140 = vpop.permute.xlu0 %139
  %142 = vset.pattern.permute.xlu0 2
  %143 = vperm.xlu0 %142, %v22
  %v144 = vpop.permute.xlu0 %143
  %146 = vset.pattern.permute.xlu0 2
  %147 = vperm.xlu0 %146, %v23
  %v148 = vpop.permute.xlu0 %147
  %v150 = vlaneseq
  %v151 = vshrl.u32 %v150, 7
  %v152 = vsub.s32 2, %v151
  %v153 = vrot.slane %v28, %v152
  %v154 = vlaneseq
  %v155 = vshrl.u32 %v154, 7
  %v156 = vsub.s32 6, %v155
  %v157 = vrot.slane %v28, %v156
  %v160 = vlaneseq
  %v161 = vshrl.u32 %v160, 7
  %v162 = vsub.s32 2, %v161
  %v163 = vrot.slane %v153, %v162
  %v164 = vlaneseq
  %v165 = vshrl.u32 %v164, 7
  %v166 = vsub.s32 2, %v165
  %v167 = vrot.slane %v157, %v166
  %v168 = vmul.f32 %v136, %v163
  %v169 = vmul.f32 %v136, %v167
  %v170 = vmul.f32 %v140, %v163
  %v171 = vmul.f32 %v140, %v167
  %v172 = vmul.f32 %v144, %v163
  %v173 = vmul.f32 %v144, %v167
  %v174 = vmul.f32 %v148, %v163
  %v175 = vmul.f32 %v148, %v167
  %v176 = vadd.f32 %v126, %v168
  %v177 = vadd.f32 %v127, %v169
  %v178 = vadd.f32 %v128, %v170
  %v179 = vadd.f32 %v129, %v171
  %v180 = vadd.f32 %v130, %v172
  %v181 = vadd.f32 %v131, %v173
  %v182 = vadd.f32 %v132, %v174
  %v183 = vadd.f32 %v133, %v175
  %185 = vset.pattern.permute.xlu0 0
  %186 = vperm.xlu0 %185, %v24
  %v187 = vpop.permute.xlu0 %186
  %190 = vset.pattern.permute.xlu0 0
  %191 = vperm.xlu0 %190, %v25
  %v192 = vpop.permute.xlu0 %191
  %195 = vset.pattern.permute.xlu0 0
  %196 = vperm.xlu0 %195, %v26
  %v197 = vpop.permute.xlu0 %196
  %200 = vset.pattern.permute.xlu0 0
  %201 = vperm.xlu0 %200, %v27
  %v202 = vpop.permute.xlu0 %201
  %v204 = vadd.f32 %v176, %v187
  %v205 = vadd.f32 %v177, %v187
  %v206 = vadd.f32 %v178, %v192
  %v207 = vadd.f32 %v179, %v192
  %v208 = vadd.f32 %v180, %v197
  %v209 = vadd.f32 %v181, %v197
  %v210 = vadd.f32 %v182, %v202
  %v211 = vadd.f32 %v183, %v202
  %v212 = vmax.f32 %v204, 0.0
  %v213 = vmax.f32 %v205, 0.0
  %v214 = vmax.f32 %v206, 0.0
  %v215 = vmax.f32 %v207, 0.0
  %v216 = vmax.f32 %v208, 0.0
  %v217 = vmax.f32 %v209, 0.0
  %v218 = vmax.f32 %v210, 0.0
  %v219 = vmax.f32 %v211, 0.0
  %220 = vst [vmem:[#allocation2] sm:$0xff] %v212
  %221 = vst [vmem:[#allocation2 + $0x8] sm:$0xff] %v213
  %222 = vst [vmem:[#allocation2 + $0x80] sm:$0xff] %v214
  %223 = vst [vmem:[#allocation2 + $0x88] sm:$0xff] %v215
  %224 = vst [vmem:[#allocation2 + $0x100] sm:$0xff] %v216
  %225 = vst [vmem:[#allocation2 + $0x108] sm:$0xff] %v217
  %226 = vst [vmem:[#allocation2 + $0x180] sm:$0xff] %v218
  %227 = vst [vmem:[#allocation2 + $0x188] sm:$0xff] %v219
  %s228 = scalar_lea.vmem %s0, 8
  %v229 = vld [vmem:[%s228] sm:$0x77]
  %v231 = vlaneseq
  %v232 = vshrl.u32 %v231, 7
  %v233 = vsub.s32 0, %v232
  %v234 = vrot.slane %v229, %v233
  %v235 = vlaneseq
  %v236 = vshrl.u32 %v235, 7
  %v237 = vsub.s32 4, %v236
  %v238 = vrot.slane %v229, %v237
  %v241 = vlaneseq
  %v242 = vshrl.u32 %v241, 7
  %v243 = vsub.s32 0, %v242
  %v244 = vrot.slane %v234, %v243
  %v245 = vlaneseq
  %v246 = vshrl.u32 %v245, 7
  %v247 = vsub.s32 0, %v246
  %v248 = vrot.slane %v238, %v247
  %v249 = vmul.f32 %v32, %v244
  %v250 = vmul.f32 %v32, %v248
  %v251 = vmul.f32 %v37, %v244
  %v252 = vmul.f32 %v37, %v248
  %v253 = vmul.f32 %v42, %v244
  %v254 = vmul.f32 %v42, %v248
  %v255 = vmul.f32 %v47, %v244
  %v256 = vmul.f32 %v47, %v248
  %v257 = vadd.f32 %v249, 0.0
  %v258 = vadd.f32 %v250, 0.0
  %v259 = vadd.f32 %v251, 0.0
  %v260 = vadd.f32 %v252, 0.0
  %v261 = vadd.f32 %v253, 0.0
  %v262 = vadd.f32 %v254, 0.0
  %v263 = vadd.f32 %v255, 0.0
  %v264 = vadd.f32 %v256, 0.0
  %v265 = vlaneseq
  %v266 = vshrl.u32 %v265, 7
  %v267 = vsub.s32 1, %v266
  %v268 = vrot.slane %v229, %v267
  %v269 = vlaneseq
  %v270 = vshrl.u32 %v269, 7
  %v271 = vsub.s32 5, %v270
  %v272 = vrot.slane %v229, %v271
  %v275 = vlaneseq
  %v276 = vshrl.u32 %v275, 7
  %v277 = vsub.s32 1, %v276
  %v278 = vrot.slane %v268, %v277
  %v279 = vlaneseq
  %v280 = vshrl.u32 %v279, 7
  %v281 = vsub.s32 1, %v280
  %v282 = vrot.slane %v272, %v281
  %v283 = vmul.f32 %v86, %v278
  %v284 = vmul.f32 %v86, %v282
  %v285 = vmul.f32 %v90, %v278
  %v286 = vmul.f32 %v90, %v282
  %v287 = vmul.f32 %v94, %v278
  %v288 = vmul.f32 %v94, %v282
  %v289 = vmul.f32 %v98, %v278
  %v290 = vmul.f32 %v98, %v282
  %v291 = vadd.f32 %v257, %v283
  %v292 = vadd.f32 %v258, %v284
  %v293 = vadd.f32 %v259, %v285
  %v294 = vadd.f32 %v260, %v286
  %v295 = vadd.f32 %v261, %v287
  %v296 = vadd.f32 %v262, %v288
  %v297 = vadd.f32 %v263, %v289
  %v298 = vadd.f32 %v264, %v290
  %v299 = vlaneseq
  %v300 = vshrl.u32 %v299, 7
  %v301 = vsub.s32 2, %v300
  %v302 = vrot.slane %v229, %v301
  %v303 = vlaneseq
  %v304 = vshrl.u32 %v303, 7
  %v305 = vsub.s32 6, %v304
  %v306 = vrot.slane %v229, %v305
  %v309 = vlaneseq
  %v310 = vshrl.u32 %v309, 7
  %v311 = vsub.s32 2, %v310
  %v312 = vrot.slane %v302, %v311
  %v313 = vlaneseq
  %v314 = vshrl.u32 %v313, 7
  %v315 = vsub.s32 2, %v314
  %v316 = vrot.slane %v306, %v315
  %v317 = vmul.f32 %v136, %v312
  %v318 = vmul.f32 %v136, %v316
  %v319 = vmul.f32 %v140, %v312
  %v320 = vmul.f32 %v140, %v316
  %v321 = vmul.f32 %v144, %v312
  %v322 = vmul.f32 %v144, %v316
  %v323 = vmul.f32 %v148, %v312
  %v324 = vmul.f32 %v148, %v316
  %v325 = vadd.f32 %v291, %v317
  %v326 = vadd.f32 %v292, %v318
  %v327 = vadd.f32 %v293, %v319
  %v328 = vadd.f32 %v294, %v320
  %v329 = vadd.f32 %v295, %v321
  %v330 = vadd.f32 %v296, %v322
  %v331 = vadd.f32 %v297, %v323
  %v332 = vadd.f32 %v298, %v324
  %v333 = vadd.f32 %v325, %v187
  %v334 = vadd.f32 %v326, %v187
  %v335 = vadd.f32 %v327, %v192
  %v336 = vadd.f32 %v328, %v192
  %v337 = vadd.f32 %v329, %v197
  %v338 = vadd.f32 %v330, %v197
  %v339 = vadd.f32 %v331, %v202
  %v340 = vadd.f32 %v332, %v202
  %v341 = vmax.f32 %v333, 0.0
  %v342 = vmax.f32 %v334, 0.0
  %v343 = vmax.f32 %v335, 0.0
  %v344 = vmax.f32 %v336, 0.0
  %v345 = vmax.f32 %v337, 0.0
  %v346 = vmax.f32 %v338, 0.0
  %v347 = vmax.f32 %v339, 0.0
  %v348 = vmax.f32 %v340, 0.0
  %349 = vst [vmem:[#allocation2 + $0x10] sm:$0xff] %v341
  %350 = vst [vmem:[#allocation2 + $0x18] sm:$0xff] %v342
  %351 = vst [vmem:[#allocation2 + $0x90] sm:$0xff] %v343
  %352 = vst [vmem:[#allocation2 + $0x98] sm:$0xff] %v344
  %353 = vst [vmem:[#allocation2 + $0x110] sm:$0xff] %v345
  %354 = vst [vmem:[#allocation2 + $0x118] sm:$0xff] %v346
  %355 = vst [vmem:[#allocation2 + $0x190] sm:$0xff] %v347
  %356 = vst [vmem:[#allocation2 + $0x198] sm:$0xff] %v348
  %s357 = scalar_lea.vmem %s0, 16
  %v358 = vld [vmem:[%s357] sm:$0x77]
  %v360 = vlaneseq
  %v361 = vshrl.u32 %v360, 7
  %v362 = vsub.s32 0, %v361
  %v363 = vrot.slane %v358, %v362
  %v364 = vlaneseq
  %v365 = vshrl.u32 %v364, 7
  %v366 = vsub.s32 4, %v365
  %v367 = vrot.slane %v358, %v366
  %v370 = vlaneseq
  %v371 = vshrl.u32 %v370, 7
  %v372 = vsub.s32 0, %v371
  %v373 = vrot.slane %v363, %v372
  %v374 = vlaneseq
  %v375 = vshrl.u32 %v374, 7
  %v376 = vsub.s32 0, %v375
  %v377 = vrot.slane %v367, %v376
  %v378 = vmul.f32 %v32, %v373
  %v379 = vmul.f32 %v32, %v377
  %v380 = vmul.f32 %v37, %v373
  %v381 = vmul.f32 %v37, %v377
  %v382 = vmul.f32 %v42, %v373
  %v383 = vmul.f32 %v42, %v377
  %v384 = vmul.f32 %v47, %v373
  %v385 = vmul.f32 %v47, %v377
  %v386 = vadd.f32 %v378, 0.0
  %v387 = vadd.f32 %v379, 0.0
  %v388 = vadd.f32 %v380, 0.0
  %v389 = vadd.f32 %v381, 0.0
  %v390 = vadd.f32 %v382, 0.0
  %v391 = vadd.f32 %v383, 0.0
  %v392 = vadd.f32 %v384, 0.0
  %v393 = vadd.f32 %v385, 0.0
  %v394 = vlaneseq
  %v395 = vshrl.u32 %v394, 7
  %v396 = vsub.s32 1, %v395
  %v397 = vrot.slane %v358, %v396
  %v398 = vlaneseq
  %v399 = vshrl.u32 %v398, 7
  %v400 = vsub.s32 5, %v399
  %v401 = vrot.slane %v358, %v400
  %v404 = vlaneseq
  %v405 = vshrl.u32 %v404, 7
  %v406 = vsub.s32 1, %v405
  %v407 = vrot.slane %v397, %v406
  %v408 = vlaneseq
  %v409 = vshrl.u32 %v408, 7
  %v410 = vsub.s32 1, %v409
  %v411 = vrot.slane %v401, %v410
  %v412 = vmul.f32 %v86, %v407
  %v413 = vmul.f32 %v86, %v411
  %v414 = vmul.f32 %v90, %v407
  %v415 = vmul.f32 %v90, %v411
  %v416 = vmul.f32 %v94, %v407
  %v417 = vmul.f32 %v94, %v411
  %v418 = vmul.f32 %v98, %v407
  %v419 = vmul.f32 %v98, %v411
  %v420 = vadd.f32 %v386, %v412
  %v421 = vadd.f32 %v387, %v413
  %v422 = vadd.f32 %v388, %v414
  %v423 = vadd.f32 %v389, %v415
  %v424 = vadd.f32 %v390, %v416
  %v425 = vadd.f32 %v391, %v417
  %v426 = vadd.f32 %v392, %v418
  %v427 = vadd.f32 %v393, %v419
  %v428 = vlaneseq
  %v429 = vshrl.u32 %v428, 7
  %v430 = vsub.s32 2, %v429
  %v431 = vrot.slane %v358, %v430
  %v432 = vlaneseq
  %v433 = vshrl.u32 %v432, 7
  %v434 = vsub.s32 6, %v433
  %v435 = vrot.slane %v358, %v434
  %v438 = vlaneseq
  %v439 = vshrl.u32 %v438, 7
  %v440 = vsub.s32 2, %v439
  %v441 = vrot.slane %v431, %v440
  %v442 = vlaneseq
  %v443 = vshrl.u32 %v442, 7
  %v444 = vsub.s32 2, %v443
  %v445 = vrot.slane %v435, %v444
  %v446 = vmul.f32 %v136, %v441
  %v447 = vmul.f32 %v136, %v445
  %v448 = vmul.f32 %v140, %v441
  %v449 = vmul.f32 %v140, %v445
  %v450 = vmul.f32 %v144, %v441
  %v451 = vmul.f32 %v144, %v445
  %v452 = vmul.f32 %v148, %v441
  %v453 = vmul.f32 %v148, %v445
  %v454 = vadd.f32 %v420, %v446
  %v455 = vadd.f32 %v421, %v447
  %v456 = vadd.f32 %v422, %v448
  %v457 = vadd.f32 %v423, %v449
  %v458 = vadd.f32 %v424, %v450
  %v459 = vadd.f32 %v425, %v451
  %v460 = vadd.f32 %v426, %v452
  %v461 = vadd.f32 %v427, %v453
  %v462 = vadd.f32 %v454, %v187
  %v463 = vadd.f32 %v455, %v187
  %v464 = vadd.f32 %v456, %v192
  %v465 = vadd.f32 %v457, %v192
  %v466 = vadd.f32 %v458, %v197
  %v467 = vadd.f32 %v459, %v197
  %v468 = vadd.f32 %v460, %v202
  %v469 = vadd.f32 %v461, %v202
  %v470 = vmax.f32 %v462, 0.0
  %v471 = vmax.f32 %v463, 0.0
  %v472 = vmax.f32 %v464, 0.0
  %v473 = vmax.f32 %v465, 0.0
  %v474 = vmax.f32 %v466, 0.0
  %v475 = vmax.f32 %v467, 0.0
  %v476 = vmax.f32 %v468, 0.0
  %v477 = vmax.f32 %v469, 0.0
  %478 = vst [vmem:[#allocation2 + $0x20] sm:$0xff] %v470
  %479 = vst [vmem:[#allocation2 + $0x28] sm:$0xff] %v471
  %480 = vst [vmem:[#allocation2 + $0xa0] sm:$0xff] %v472
  %481 = vst [vmem:[#allocation2 + $0xa8] sm:$0xff] %v473
  %482 = vst [vmem:[#allocation2 + $0x120] sm:$0xff] %v474
  %483 = vst [vmem:[#allocation2 + $0x128] sm:$0xff] %v475
  %484 = vst [vmem:[#allocation2 + $0x1a0] sm:$0xff] %v476
  %485 = vst [vmem:[#allocation2 + $0x1a8] sm:$0xff] %v477
  %s486 = scalar_lea.vmem %s0, 24
  %v487 = vld [vmem:[%s486] sm:$0x77]
  %v489 = vlaneseq
  %v490 = vshrl.u32 %v489, 7
  %v491 = vsub.s32 0, %v490
  %v492 = vrot.slane %v487, %v491
  %v493 = vlaneseq
  %v494 = vshrl.u32 %v493, 7
  %v495 = vsub.s32 4, %v494
  %v496 = vrot.slane %v487, %v495
  %v499 = vlaneseq
  %v500 = vshrl.u32 %v499, 7
  %v501 = vsub.s32 0, %v500
  %v502 = vrot.slane %v492, %v501
  %v503 = vlaneseq
  %v504 = vshrl.u32 %v503, 7
  %v505 = vsub.s32 0, %v504
  %v506 = vrot.slane %v496, %v505
  %v507 = vmul.f32 %v32, %v502
  %v508 = vmul.f32 %v32, %v506
  %v509 = vmul.f32 %v37, %v502
  %v510 = vmul.f32 %v37, %v506
  %v511 = vmul.f32 %v42, %v502
  %v512 = vmul.f32 %v42, %v506
  %v513 = vmul.f32 %v47, %v502
  %v514 = vmul.f32 %v47, %v506
  %v515 = vadd.f32 %v507, 0.0
  %v516 = vadd.f32 %v508, 0.0
  %v517 = vadd.f32 %v509, 0.0
  %v518 = vadd.f32 %v510, 0.0
  %v519 = vadd.f32 %v511, 0.0
  %v520 = vadd.f32 %v512, 0.0
  %v521 = vadd.f32 %v513, 0.0
  %v522 = vadd.f32 %v514, 0.0
  %v523 = vlaneseq
  %v524 = vshrl.u32 %v523, 7
  %v525 = vsub.s32 1, %v524
  %v526 = vrot.slane %v487, %v525
  %v527 = vlaneseq
  %v528 = vshrl.u32 %v527, 7
  %v529 = vsub.s32 5, %v528
  %v530 = vrot.slane %v487, %v529
  %v533 = vlaneseq
  %v534 = vshrl.u32 %v533, 7
  %v535 = vsub.s32 1, %v534
  %v536 = vrot.slane %v526, %v535
  %v537 = vlaneseq
  %v538 = vshrl.u32 %v537, 7
  %v539 = vsub.s32 1, %v538
  %v540 = vrot.slane %v530, %v539
  %v541 = vmul.f32 %v86, %v536
  %v542 = vmul.f32 %v86, %v540
  %v543 = vmul.f32 %v90, %v536
  %v544 = vmul.f32 %v90, %v540
  %v545 = vmul.f32 %v94, %v536
  %v546 = vmul.f32 %v94, %v540
  %v547 = vmul.f32 %v98, %v536
  %v548 = vmul.f32 %v98, %v540
  %v549 = vadd.f32 %v515, %v541
  %v550 = vadd.f32 %v516, %v542
  %v551 = vadd.f32 %v517, %v543
  %v552 = vadd.f32 %v518, %v544
  %v553 = vadd.f32 %v519, %v545
  %v554 = vadd.f32 %v520, %v546
  %v555 = vadd.f32 %v521, %v547
  %v556 = vadd.f32 %v522, %v548
  %v557 = vlaneseq
  %v558 = vshrl.u32 %v557, 7
  %v559 = vsub.s32 2, %v558
  %v560 = vrot.slane %v487, %v559
  %v561 = vlaneseq
  %v562 = vshrl.u32 %v561, 7
  %v563 = vsub.s32 6, %v562
  %v564 = vrot.slane %v487, %v563
  %v567 = vlaneseq
  %v568 = vshrl.u32 %v567, 7
  %v569 = vsub.s32 2, %v568
  %v570 = vrot.slane %v560, %v569
  %v571 = vlaneseq
  %v572 = vshrl.u32 %v571, 7
  %v573 = vsub.s32 2, %v572
  %v574 = vrot.slane %v564, %v573
  %v575 = vmul.f32 %v136, %v570
  %v576 = vmul.f32 %v136, %v574
  %v577 = vmul.f32 %v140, %v570
  %v578 = vmul.f32 %v140, %v574
  %v579 = vmul.f32 %v144, %v570
  %v580 = vmul.f32 %v144, %v574
  %v581 = vmul.f32 %v148, %v570
  %v582 = vmul.f32 %v148, %v574
  %v583 = vadd.f32 %v549, %v575
  %v584 = vadd.f32 %v550, %v576
  %v585 = vadd.f32 %v551, %v577
  %v586 = vadd.f32 %v552, %v578
  %v587 = vadd.f32 %v553, %v579
  %v588 = vadd.f32 %v554, %v580
  %v589 = vadd.f32 %v555, %v581
  %v590 = vadd.f32 %v556, %v582
  %v591 = vadd.f32 %v583, %v187
  %v592 = vadd.f32 %v584, %v187
  %v593 = vadd.f32 %v585, %v192
  %v594 = vadd.f32 %v586, %v192
  %v595 = vadd.f32 %v587, %v197
  %v596 = vadd.f32 %v588, %v197
  %v597 = vadd.f32 %v589, %v202
  %v598 = vadd.f32 %v590, %v202
  %v599 = vmax.f32 %v591, 0.0
  %v600 = vmax.f32 %v592, 0.0
  %v601 = vmax.f32 %v593, 0.0
  %v602 = vmax.f32 %v594, 0.0
  %v603 = vmax.f32 %v595, 0.0
  %v604 = vmax.f32 %v596, 0.0
  %v605 = vmax.f32 %v597, 0.0
  %v606 = vmax.f32 %v598, 0.0
  %607 = vst [vmem:[#allocation2 + $0x30] sm:$0xff] %v599
  %608 = vst [vmem:[#allocation2 + $0x38] sm:$0xff] %v600
  %609 = vst [vmem:[#allocation2 + $0xb0] sm:$0xff] %v601
  %610 = vst [vmem:[#allocation2 + $0xb8] sm:$0xff] %v602
  %611 = vst [vmem:[#allocation2 + $0x130] sm:$0xff] %v603
  %612 = vst [vmem:[#allocation2 + $0x138] sm:$0xff] %v604
  %613 = vst [vmem:[#allocation2 + $0x1b0] sm:$0xff] %v605
  %614 = vst [vmem:[#allocation2 + $0x1b8] sm:$0xff] %v606
  %s615 = scalar_lea.vmem %s0, 32
  %v616 = vld [vmem:[%s615] sm:$0x77]
  %v618 = vlaneseq
  %v619 = vshrl.u32 %v618, 7
  %v620 = vsub.s32 0, %v619
  %v621 = vrot.slane %v616, %v620
  %v622 = vlaneseq
  %v623 = vshrl.u32 %v622, 7
  %v624 = vsub.s32 4, %v623
  %v625 = vrot.slane %v616, %v624
  %v628 = vlaneseq
  %v629 = vshrl.u32 %v628, 7
  %v630 = vsub.s32 0, %v629
  %v631 = vrot.slane %v621, %v630
  %v632 = vlaneseq
  %v633 = vshrl.u32 %v632, 7
  %v634 = vsub.s32 0, %v633
  %v635 = vrot.slane %v625, %v634
  %v636 = vmul.f32 %v32, %v631
  %v637 = vmul.f32 %v32, %v635
  %v638 = vmul.f32 %v37, %v631
  %v639 = vmul.f32 %v37, %v635
  %v640 = vmul.f32 %v42, %v631
  %v641 = vmul.f32 %v42, %v635
  %v642 = vmul.f32 %v47, %v631
  %v643 = vmul.f32 %v47, %v635
  %v644 = vadd.f32 %v636, 0.0
  %v645 = vadd.f32 %v637, 0.0
  %v646 = vadd.f32 %v638, 0.0
  %v647 = vadd.f32 %v639, 0.0
  %v648 = vadd.f32 %v640, 0.0
  %v649 = vadd.f32 %v641, 0.0
  %v650 = vadd.f32 %v642, 0.0
  %v651 = vadd.f32 %v643, 0.0
  %v652 = vlaneseq
  %v653 = vshrl.u32 %v652, 7
  %v654 = vsub.s32 1, %v653
  %v655 = vrot.slane %v616, %v654
  %v656 = vlaneseq
  %v657 = vshrl.u32 %v656, 7
  %v658 = vsub.s32 5, %v657
  %v659 = vrot.slane %v616, %v658
  %v662 = vlaneseq
  %v663 = vshrl.u32 %v662, 7
  %v664 = vsub.s32 1, %v663
  %v665 = vrot.slane %v655, %v664
  %v666 = vlaneseq
  %v667 = vshrl.u32 %v666, 7
  %v668 = vsub.s32 1, %v667
  %v669 = vrot.slane %v659, %v668
  %v670 = vmul.f32 %v86, %v665
  %v671 = vmul.f32 %v86, %v669
  %v672 = vmul.f32 %v90, %v665
  %v673 = vmul.f32 %v90, %v669
  %v674 = vmul.f32 %v94, %v665
  %v675 = vmul.f32 %v94, %v669
  %v676 = vmul.f32 %v98, %v665
  %v677 = vmul.f32 %v98, %v669
  %v678 = vadd.f32 %v644, %v670
  %v679 = vadd.f32 %v645, %v671
  %v680 = vadd.f32 %v646, %v672
  %v681 = vadd.f32 %v647, %v673
  %v682 = vadd.f32 %v648, %v674
  %v683 = vadd.f32 %v649, %v675
  %v684 = vadd.f32 %v650, %v676
  %v685 = vadd.f32 %v651, %v677
  %v686 = vlaneseq
  %v687 = vshrl.u32 %v686, 7
  %v688 = vsub.s32 2, %v687
  %v689 = vrot.slane %v616, %v688
  %v690 = vlaneseq
  %v691 = vshrl.u32 %v690, 7
  %v692 = vsub.s32 6, %v691
  %v693 = vrot.slane %v616, %v692
  %v696 = vlaneseq
  %v697 = vshrl.u32 %v696, 7
  %v698 = vsub.s32 2, %v697
  %v699 = vrot.slane %v689, %v698
  %v700 = vlaneseq
  %v701 = vshrl.u32 %v700, 7
  %v702 = vsub.s32 2, %v701
  %v703 = vrot.slane %v693, %v702
  %v704 = vmul.f32 %v136, %v699
  %v705 = vmul.f32 %v136, %v703
  %v706 = vmul.f32 %v140, %v699
  %v707 = vmul.f32 %v140, %v703
  %v708 = vmul.f32 %v144, %v699
  %v709 = vmul.f32 %v144, %v703
  %v710 = vmul.f32 %v148, %v699
  %v711 = vmul.f32 %v148, %v703
  %v712 = vadd.f32 %v678, %v704
  %v713 = vadd.f32 %v679, %v705
  %v714 = vadd.f32 %v680, %v706
  %v715 = vadd.f32 %v681, %v707
  %v716 = vadd.f32 %v682, %v708
  %v717 = vadd.f32 %v683, %v709
  %v718 = vadd.f32 %v684, %v710
  %v719 = vadd.f32 %v685, %v711
  %v720 = vadd.f32 %v712, %v187
  %v721 = vadd.f32 %v713, %v187
  %v722 = vadd.f32 %v714, %v192
  %v723 = vadd.f32 %v715, %v192
  %v724 = vadd.f32 %v716, %v197
  %v725 = vadd.f32 %v717, %v197
  %v726 = vadd.f32 %v718, %v202
  %v727 = vadd.f32 %v719, %v202
  %v728 = vmax.f32 %v720, 0.0
  %v729 = vmax.f32 %v721, 0.0
  %v730 = vmax.f32 %v722, 0.0
  %v731 = vmax.f32 %v723, 0.0
  %v732 = vmax.f32 %v724, 0.0
  %v733 = vmax.f32 %v725, 0.0
  %v734 = vmax.f32 %v726, 0.0
  %v735 = vmax.f32 %v727, 0.0
  %736 = vst [vmem:[#allocation2 + $0x40] sm:$0xff] %v728
  %737 = vst [vmem:[#allocation2 + $0x48] sm:$0xff] %v729
  %738 = vst [vmem:[#allocation2 + $0xc0] sm:$0xff] %v730
  %739 = vst [vmem:[#allocation2 + $0xc8] sm:$0xff] %v731
  %740 = vst [vmem:[#allocation2 + $0x140] sm:$0xff] %v732
  %741 = vst [vmem:[#allocation2 + $0x148] sm:$0xff] %v733
  %742 = vst [vmem:[#allocation2 + $0x1c0] sm:$0xff] %v734
  %743 = vst [vmem:[#allocation2 + $0x1c8] sm:$0xff] %v735
  %s744 = scalar_lea.vmem %s0, 40
  %v745 = vld [vmem:[%s744] sm:$0x77]
  %v747 = vlaneseq
  %v748 = vshrl.u32 %v747, 7
  %v749 = vsub.s32 0, %v748
  %v750 = vrot.slane %v745, %v749
  %v751 = vlaneseq
  %v752 = vshrl.u32 %v751, 7
  %v753 = vsub.s32 4, %v752
  %v754 = vrot.slane %v745, %v753
  %v757 = vlaneseq
  %v758 = vshrl.u32 %v757, 7
  %v759 = vsub.s32 0, %v758
  %v760 = vrot.slane %v750, %v759
  %v761 = vlaneseq
  %v762 = vshrl.u32 %v761, 7
  %v763 = vsub.s32 0, %v762
  %v764 = vrot.slane %v754, %v763
  %v765 = vmul.f32 %v32, %v760
  %v766 = vmul.f32 %v32, %v764
  %v767 = vmul.f32 %v37, %v760
  %v768 = vmul.f32 %v37, %v764
  %v769 = vmul.f32 %v42, %v760
  %v770 = vmul.f32 %v42, %v764
  %v771 = vmul.f32 %v47, %v760
  %v772 = vmul.f32 %v47, %v764
  %v773 = vadd.f32 %v765, 0.0
  %v774 = vadd.f32 %v766, 0.0
  %v775 = vadd.f32 %v767, 0.0
  %v776 = vadd.f32 %v768, 0.0
  %v777 = vadd.f32 %v769, 0.0
  %v778 = vadd.f32 %v770, 0.0
  %v779 = vadd.f32 %v771, 0.0
  %v780 = vadd.f32 %v772, 0.0
  %v781 = vlaneseq
  %v782 = vshrl.u32 %v781, 7
  %v783 = vsub.s32 1, %v782
  %v784 = vrot.slane %v745, %v783
  %v785 = vlaneseq
  %v786 = vshrl.u32 %v785, 7
  %v787 = vsub.s32 5, %v786
  %v788 = vrot.slane %v745, %v787
  %v791 = vlaneseq
  %v792 = vshrl.u32 %v791, 7
  %v793 = vsub.s32 1, %v792
  %v794 = vrot.slane %v784, %v793
  %v795 = vlaneseq
  %v796 = vshrl.u32 %v795, 7
  %v797 = vsub.s32 1, %v796
  %v798 = vrot.slane %v788, %v797
  %v799 = vmul.f32 %v86, %v794
  %v800 = vmul.f32 %v86, %v798
  %v801 = vmul.f32 %v90, %v794
  %v802 = vmul.f32 %v90, %v798
  %v803 = vmul.f32 %v94, %v794
  %v804 = vmul.f32 %v94, %v798
  %v805 = vmul.f32 %v98, %v794
  %v806 = vmul.f32 %v98, %v798
  %v807 = vadd.f32 %v773, %v799
  %v808 = vadd.f32 %v774, %v800
  %v809 = vadd.f32 %v775, %v801
  %v810 = vadd.f32 %v776, %v802
  %v811 = vadd.f32 %v777, %v803
  %v812 = vadd.f32 %v778, %v804
  %v813 = vadd.f32 %v779, %v805
  %v814 = vadd.f32 %v780, %v806
  %v815 = vlaneseq
  %v816 = vshrl.u32 %v815, 7
  %v817 = vsub.s32 2, %v816
  %v818 = vrot.slane %v745, %v817
  %v819 = vlaneseq
  %v820 = vshrl.u32 %v819, 7
  %v821 = vsub.s32 6, %v820
  %v822 = vrot.slane %v745, %v821
  %v825 = vlaneseq
  %v826 = vshrl.u32 %v825, 7
  %v827 = vsub.s32 2, %v826
  %v828 = vrot.slane %v818, %v827
  %v829 = vlaneseq
  %v830 = vshrl.u32 %v829, 7
  %v831 = vsub.s32 2, %v830
  %v832 = vrot.slane %v822, %v831
  %v833 = vmul.f32 %v136, %v828
  %v834 = vmul.f32 %v136, %v832
  %v835 = vmul.f32 %v140, %v828
  %v836 = vmul.f32 %v140, %v832
  %v837 = vmul.f32 %v144, %v828
  %v838 = vmul.f32 %v144, %v832
  %v839 = vmul.f32 %v148, %v828
  %v840 = vmul.f32 %v148, %v832
  %v841 = vadd.f32 %v807, %v833
  %v842 = vadd.f32 %v808, %v834
  %v843 = vadd.f32 %v809, %v835
  %v844 = vadd.f32 %v810, %v836
  %v845 = vadd.f32 %v811, %v837
  %v846 = vadd.f32 %v812, %v838
  %v847 = vadd.f32 %v813, %v839
  %v848 = vadd.f32 %v814, %v840
  %v849 = vadd.f32 %v841, %v187
  %v850 = vadd.f32 %v842, %v187
  %v851 = vadd.f32 %v843, %v192
  %v852 = vadd.f32 %v844, %v192
  %v853 = vadd.f32 %v845, %v197
  %v854 = vadd.f32 %v846, %v197
  %v855 = vadd.f32 %v847, %v202
  %v856 = vadd.f32 %v848, %v202
  %v857 = vmax.f32 %v849, 0.0
  %v858 = vmax.f32 %v850, 0.0
  %v859 = vmax.f32 %v851, 0.0
  %v860 = vmax.f32 %v852, 0.0
  %v861 = vmax.f32 %v853, 0.0
  %v862 = vmax.f32 %v854, 0.0
  %v863 = vmax.f32 %v855, 0.0
  %v864 = vmax.f32 %v856, 0.0
  %865 = vst [vmem:[#allocation2 + $0x50] sm:$0xff] %v857
  %866 = vst [vmem:[#allocation2 + $0x58] sm:$0xff] %v858
  %867 = vst [vmem:[#allocation2 + $0xd0] sm:$0xff] %v859
  %868 = vst [vmem:[#allocation2 + $0xd8] sm:$0xff] %v860
  %869 = vst [vmem:[#allocation2 + $0x150] sm:$0xff] %v861
  %870 = vst [vmem:[#allocation2 + $0x158] sm:$0xff] %v862
  %871 = vst [vmem:[#allocation2 + $0x1d0] sm:$0xff] %v863
  %872 = vst [vmem:[#allocation2 + $0x1d8] sm:$0xff] %v864
  %s873 = scalar_lea.vmem %s0, 48
  %v874 = vld [vmem:[%s873] sm:$0x77]
  %v876 = vlaneseq
  %v877 = vshrl.u32 %v876, 7
  %v878 = vsub.s32 0, %v877
  %v879 = vrot.slane %v874, %v878
  %v880 = vlaneseq
  %v881 = vshrl.u32 %v880, 7
  %v882 = vsub.s32 4, %v881
  %v883 = vrot.slane %v874, %v882
  %v886 = vlaneseq
  %v887 = vshrl.u32 %v886, 7
  %v888 = vsub.s32 0, %v887
  %v889 = vrot.slane %v879, %v888
  %v890 = vlaneseq
  %v891 = vshrl.u32 %v890, 7
  %v892 = vsub.s32 0, %v891
  %v893 = vrot.slane %v883, %v892
  %v894 = vmul.f32 %v32, %v889
  %v895 = vmul.f32 %v32, %v893
  %v896 = vmul.f32 %v37, %v889
  %v897 = vmul.f32 %v37, %v893
  %v898 = vmul.f32 %v42, %v889
  %v899 = vmul.f32 %v42, %v893
  %v900 = vmul.f32 %v47, %v889
  %v901 = vmul.f32 %v47, %v893
  %v902 = vadd.f32 %v894, 0.0
  %v903 = vadd.f32 %v895, 0.0
  %v904 = vadd.f32 %v896, 0.0
  %v905 = vadd.f32 %v897, 0.0
  %v906 = vadd.f32 %v898, 0.0
  %v907 = vadd.f32 %v899, 0.0
  %v908 = vadd.f32 %v900, 0.0
  %v909 = vadd.f32 %v901, 0.0
  %v910 = vlaneseq
  %v911 = vshrl.u32 %v910, 7
  %v912 = vsub.s32 1, %v911
  %v913 = vrot.slane %v874, %v912
  %v914 = vlaneseq
  %v915 = vshrl.u32 %v914, 7
  %v916 = vsub.s32 5, %v915
  %v917 = vrot.slane %v874, %v916
  %v920 = vlaneseq
  %v921 = vshrl.u32 %v920, 7
  %v922 = vsub.s32 1, %v921
  %v923 = vrot.slane %v913, %v922
  %v924 = vlaneseq
  %v925 = vshrl.u32 %v924, 7
  %v926 = vsub.s32 1, %v925
  %v927 = vrot.slane %v917, %v926
  %v928 = vmul.f32 %v86, %v923
  %v929 = vmul.f32 %v86, %v927
  %v930 = vmul.f32 %v90, %v923
  %v931 = vmul.f32 %v90, %v927
  %v932 = vmul.f32 %v94, %v923
  %v933 = vmul.f32 %v94, %v927
  %v934 = vmul.f32 %v98, %v923
  %v935 = vmul.f32 %v98, %v927
  %v936 = vadd.f32 %v902, %v928
  %v937 = vadd.f32 %v903, %v929
  %v938 = vadd.f32 %v904, %v930
  %v939 = vadd.f32 %v905, %v931
  %v940 = vadd.f32 %v906, %v932
  %v941 = vadd.f32 %v907, %v933
  %v942 = vadd.f32 %v908, %v934
  %v943 = vadd.f32 %v909, %v935
  %v944 = vlaneseq
  %v945 = vshrl.u32 %v944, 7
  %v946 = vsub.s32 2, %v945
  %v947 = vrot.slane %v874, %v946
  %v948 = vlaneseq
  %v949 = vshrl.u32 %v948, 7
  %v950 = vsub.s32 6, %v949
  %v951 = vrot.slane %v874, %v950
  %v954 = vlaneseq
  %v955 = vshrl.u32 %v954, 7
  %v956 = vsub.s32 2, %v955
  %v957 = vrot.slane %v947, %v956
  %v958 = vlaneseq
  %v959 = vshrl.u32 %v958, 7
  %v960 = vsub.s32 2, %v959
  %v961 = vrot.slane %v951, %v960
  %v962 = vmul.f32 %v136, %v957
  %v963 = vmul.f32 %v136, %v961
  %v964 = vmul.f32 %v140, %v957
  %v965 = vmul.f32 %v140, %v961
  %v966 = vmul.f32 %v144, %v957
  %v967 = vmul.f32 %v144, %v961
  %v968 = vmul.f32 %v148, %v957
  %v969 = vmul.f32 %v148, %v961
  %v970 = vadd.f32 %v936, %v962
  %v971 = vadd.f32 %v937, %v963
  %v972 = vadd.f32 %v938, %v964
  %v973 = vadd.f32 %v939, %v965
  %v974 = vadd.f32 %v940, %v966
  %v975 = vadd.f32 %v941, %v967
  %v976 = vadd.f32 %v942, %v968
  %v977 = vadd.f32 %v943, %v969
  %v978 = vadd.f32 %v970, %v187
  %v979 = vadd.f32 %v971, %v187
  %v980 = vadd.f32 %v972, %v192
  %v981 = vadd.f32 %v973, %v192
  %v982 = vadd.f32 %v974, %v197
  %v983 = vadd.f32 %v975, %v197
  %v984 = vadd.f32 %v976, %v202
  %v985 = vadd.f32 %v977, %v202
  %v986 = vmax.f32 %v978, 0.0
  %v987 = vmax.f32 %v979, 0.0
  %v988 = vmax.f32 %v980, 0.0
  %v989 = vmax.f32 %v981, 0.0
  %v990 = vmax.f32 %v982, 0.0
  %v991 = vmax.f32 %v983, 0.0
  %v992 = vmax.f32 %v984, 0.0
  %v993 = vmax.f32 %v985, 0.0
  %994 = vst [vmem:[#allocation2 + $0x60] sm:$0xff] %v986
  %995 = vst [vmem:[#allocation2 + $0x68] sm:$0xff] %v987
  %996 = vst [vmem:[#allocation2 + $0xe0] sm:$0xff] %v988
  %997 = vst [vmem:[#allocation2 + $0xe8] sm:$0xff] %v989
  %998 = vst [vmem:[#allocation2 + $0x160] sm:$0xff] %v990
  %999 = vst [vmem:[#allocation2 + $0x168] sm:$0xff] %v991
  %1000 = vst [vmem:[#allocation2 + $0x1e0] sm:$0xff] %v992
  %1001 = vst [vmem:[#allocation2 + $0x1e8] sm:$0xff] %v993
  %s1002 = scalar_lea.vmem %s0, 56
  %v1003 = vld [vmem:[%s1002] sm:$0x77]
  %v1005 = vlaneseq
  %v1006 = vshrl.u32 %v1005, 7
  %v1007 = vsub.s32 0, %v1006
  %v1008 = vrot.slane %v1003, %v1007
  %v1009 = vlaneseq
  %v1010 = vshrl.u32 %v1009, 7
  %v1011 = vsub.s32 4, %v1010
  %v1012 = vrot.slane %v1003, %v1011
  %v1015 = vlaneseq
  %v1016 = vshrl.u32 %v1015, 7
  %v1017 = vsub.s32 0, %v1016
  %v1018 = vrot.slane %v1008, %v1017
  %v1019 = vlaneseq
  %v1020 = vshrl.u32 %v1019, 7
  %v1021 = vsub.s32 0, %v1020
  %v1022 = vrot.slane %v1012, %v1021
  %v1023 = vmul.f32 %v32, %v1018
  %v1024 = vmul.f32 %v32, %v1022
  %v1025 = vmul.f32 %v37, %v1018
  %v1026 = vmul.f32 %v37, %v1022
  %v1027 = vmul.f32 %v42, %v1018
  %v1028 = vmul.f32 %v42, %v1022
  %v1029 = vmul.f32 %v47, %v1018
  %v1030 = vmul.f32 %v47, %v1022
  %v1031 = vadd.f32 %v1023, 0.0
  %v1032 = vadd.f32 %v1024, 0.0
  %v1033 = vadd.f32 %v1025, 0.0
  %v1034 = vadd.f32 %v1026, 0.0
  %v1035 = vadd.f32 %v1027, 0.0
  %v1036 = vadd.f32 %v1028, 0.0
  %v1037 = vadd.f32 %v1029, 0.0
  %v1038 = vadd.f32 %v1030, 0.0
  %v1039 = vlaneseq
  %v1040 = vshrl.u32 %v1039, 7
  %v1041 = vsub.s32 1, %v1040
  %v1042 = vrot.slane %v1003, %v1041
  %v1043 = vlaneseq
  %v1044 = vshrl.u32 %v1043, 7
  %v1045 = vsub.s32 5, %v1044
  %v1046 = vrot.slane %v1003, %v1045
  %v1049 = vlaneseq
  %v1050 = vshrl.u32 %v1049, 7
  %v1051 = vsub.s32 1, %v1050
  %v1052 = vrot.slane %v1042, %v1051
  %v1053 = vlaneseq
  %v1054 = vshrl.u32 %v1053, 7
  %v1055 = vsub.s32 1, %v1054
  %v1056 = vrot.slane %v1046, %v1055
  %v1057 = vmul.f32 %v86, %v1052
  %v1058 = vmul.f32 %v86, %v1056
  %v1059 = vmul.f32 %v90, %v1052
  %v1060 = vmul.f32 %v90, %v1056
  %v1061 = vmul.f32 %v94, %v1052
  %v1062 = vmul.f32 %v94, %v1056
  %v1063 = vmul.f32 %v98, %v1052
  %v1064 = vmul.f32 %v98, %v1056
  %v1065 = vadd.f32 %v1031, %v1057
  %v1066 = vadd.f32 %v1032, %v1058
  %v1067 = vadd.f32 %v1033, %v1059
  %v1068 = vadd.f32 %v1034, %v1060
  %v1069 = vadd.f32 %v1035, %v1061
  %v1070 = vadd.f32 %v1036, %v1062
  %v1071 = vadd.f32 %v1037, %v1063
  %v1072 = vadd.f32 %v1038, %v1064
  %v1073 = vlaneseq
  %v1074 = vshrl.u32 %v1073, 7
  %v1075 = vsub.s32 2, %v1074
  %v1076 = vrot.slane %v1003, %v1075
  %v1077 = vlaneseq
  %v1078 = vshrl.u32 %v1077, 7
  %v1079 = vsub.s32 6, %v1078
  %v1080 = vrot.slane %v1003, %v1079
  %v1083 = vlaneseq
  %v1084 = vshrl.u32 %v1083, 7
  %v1085 = vsub.s32 2, %v1084
  %v1086 = vrot.slane %v1076, %v1085
  %v1087 = vlaneseq
  %v1088 = vshrl.u32 %v1087, 7
  %v1089 = vsub.s32 2, %v1088
  %v1090 = vrot.slane %v1080, %v1089
  %v1091 = vmul.f32 %v136, %v1086
  %v1092 = vmul.f32 %v136, %v1090
  %v1093 = vmul.f32 %v140, %v1086
  %v1094 = vmul.f32 %v140, %v1090
  %v1095 = vmul.f32 %v144, %v1086
  %v1096 = vmul.f32 %v144, %v1090
  %v1097 = vmul.f32 %v148, %v1086
  %v1098 = vmul.f32 %v148, %v1090
  %v1099 = vadd.f32 %v1065, %v1091
  %v1100 = vadd.f32 %v1066, %v1092
  %v1101 = vadd.f32 %v1067, %v1093
  %v1102 = vadd.f32 %v1068, %v1094
  %v1103 = vadd.f32 %v1069, %v1095
  %v1104 = vadd.f32 %v1070, %v1096
  %v1105 = vadd.f32 %v1071, %v1097
  %v1106 = vadd.f32 %v1072, %v1098
  %v1107 = vadd.f32 %v1099, %v187
  %v1108 = vadd.f32 %v1100, %v187
  %v1109 = vadd.f32 %v1101, %v192
  %v1110 = vadd.f32 %v1102, %v192
  %v1111 = vadd.f32 %v1103, %v197
  %v1112 = vadd.f32 %v1104, %v197
  %v1113 = vadd.f32 %v1105, %v202
  %v1114 = vadd.f32 %v1106, %v202
  %v1115 = vmax.f32 %v1107, 0.0
  %v1116 = vmax.f32 %v1108, 0.0
  %v1117 = vmax.f32 %v1109, 0.0
  %v1118 = vmax.f32 %v1110, 0.0
  %v1119 = vmax.f32 %v1111, 0.0
  %v1120 = vmax.f32 %v1112, 0.0
  %v1121 = vmax.f32 %v1113, 0.0
  %v1122 = vmax.f32 %v1114, 0.0
  %1123 = vst [vmem:[#allocation2 + $0x70] sm:$0xff] %v1115
  %1124 = vst [vmem:[#allocation2 + $0x78] sm:$0xff] %v1116
  %1125 = vst [vmem:[#allocation2 + $0xf0] sm:$0xff] %v1117
  %1126 = vst [vmem:[#allocation2 + $0xf8] sm:$0xff] %v1118
  %1127 = vst [vmem:[#allocation2 + $0x170] sm:$0xff] %v1119
  %1128 = vst [vmem:[#allocation2 + $0x178] sm:$0xff] %v1120
  %1129 = vst [vmem:[#allocation2 + $0x1f0] sm:$0xff] %v1121
  %1130 = vst [vmem:[#allocation2 + $0x1f8] sm:$0xff] %v1122
  %v1131 = vld [vmem:[#allocation2 + $0x80] sm:$0xff]
  %v1132 = vld [vmem:[#allocation2 + $0x88] sm:$0xff]
  %v1133 = vld [vmem:[#allocation2 + $0x90] sm:$0xff]
  %v1134 = vld [vmem:[#allocation2 + $0x98] sm:$0xff]
  %v1135 = vld [vmem:[#allocation2 + $0xa0] sm:$0xff]
  %v1136 = vld [vmem:[#allocation2 + $0xa8] sm:$0xff]
  %v1137 = vld [vmem:[#allocation2 + $0xb0] sm:$0xff]
  %v1138 = vld [vmem:[#allocation2 + $0xb8] sm:$0xff]
  %v1139 = vld [vmem:[#allocation2 + $0xc0] sm:$0xff]
  %v1140 = vld [vmem:[#allocation2 + $0xc8] sm:$0xff]
  %v1141 = vld [vmem:[#allocation2 + $0xd0] sm:$0xff]
  %v1142 = vld [vmem:[#allocation2 + $0xd8] sm:$0xff]
  %v1143 = vld [vmem:[#allocation2 + $0xe0] sm:$0xff]
  %v1144 = vld [vmem:[#allocation2 + $0xe8] sm:$0xff]
  %v1145 = vld [vmem:[#allocation2 + $0xf0] sm:$0xff]
  %v1146 = vld [vmem:[#allocation2 + $0xf8] sm:$0xff]
  %v1147 = vld [vmem:[#allocation2 + $0x100] sm:$0xff]
  %v1148 = vld [vmem:[#allocation2 + $0x108] sm:$0xff]
  %v1149 = vld [vmem:[#allocation2 + $0x110] sm:$0xff]
  %v1150 = vld [vmem:[#allocation2 + $0x118] sm:$0xff]
  %v1151 = vld [vmem:[#allocation2 + $0x120] sm:$0xff]
  %v1152 = vld [vmem:[#allocation2 + $0x128] sm:$0xff]
  %v1153 = vld [vmem:[#allocation2 + $0x130] sm:$0xff]
  %v1154 = vld [vmem:[#allocation2 + $0x138] sm:$0xff]
  %v1155 = vld [vmem:[#allocation2 + $0x140] sm:$0xff]
  %v1156 = vld [vmem:[#allocation2 + $0x148] sm:$0xff]
  %v1157 = vld [vmem:[#allocation2 + $0x150] sm:$0xff]
  %v1158 = vld [vmem:[#allocation2 + $0x158] sm:$0xff]
  %v1159 = vld [vmem:[#allocation2 + $0x160] sm:$0xff]
  %v1160 = vld [vmem:[#allocation2 + $0x168] sm:$0xff]
  %v1161 = vld [vmem:[#allocation2 + $0x170] sm:$0xff]
  %v1162 = vld [vmem:[#allocation2 + $0x178] sm:$0xff]
  %v1163 = vld [vmem:[#allocation2 + $0x180] sm:$0xff]
  %v1164 = vld [vmem:[#allocation2 + $0x188] sm:$0xff]
  %v1165 = vld [vmem:[#allocation2 + $0x190] sm:$0xff]
  %v1166 = vld [vmem:[#allocation2 + $0x198] sm:$0xff]
  %v1167 = vld [vmem:[#allocation2 + $0x1a0] sm:$0xff]
  %v1168 = vld [vmem:[#allocation2 + $0x1a8] sm:$0xff]
  %v1169 = vld [vmem:[#allocation2 + $0x1b0] sm:$0xff]
  %v1170 = vld [vmem:[#allocation2 + $0x1b8] sm:$0xff]
  %v1171 = vld [vmem:[#allocation2 + $0x1c0] sm:$0xff]
  %v1172 = vld [vmem:[#allocation2 + $0x1c8] sm:$0xff]
  %v1173 = vld [vmem:[#allocation2 + $0x1d0] sm:$0xff]
  %v1174 = vld [vmem:[#allocation2 + $0x1d8] sm:$0xff]
  %v1175 = vld [vmem:[#allocation2 + $0x1e0] sm:$0xff]
  %v1176 = vld [vmem:[#allocation2 + $0x1e8] sm:$0xff]
  %v1177 = vld [vmem:[#allocation2 + $0x1f0] sm:$0xff]
  %v1178 = vld [vmem:[#allocation2 + $0x1f8] sm:$0xff]
  %1179 = vst [vmem:[#allocation3 + $0x80] sm:$0xff] %v1131
  %1180 = vst [vmem:[#allocation3 + $0x88] sm:$0xff] %v1132
  %1181 = vst [vmem:[#allocation3 + $0x90] sm:$0xff] %v1133
  %1182 = vst [vmem:[#allocation3 + $0x98] sm:$0xff] %v1134
  %1183 = vst [vmem:[#allocation3 + $0xa0] sm:$0xff] %v1135
  %1184 = vst [vmem:[#allocation3 + $0xa8] sm:$0xff] %v1136
  %1185 = vst [vmem:[#allocation3 + $0xb0] sm:$0xff] %v1137
  %1186 = vst [vmem:[#allocation3 + $0xb8] sm:$0xff] %v1138
  %1187 = vst [vmem:[#allocation3 + $0xc0] sm:$0xff] %v1139
  %1188 = vst [vmem:[#allocation3 + $0xc8] sm:$0xff] %v1140
  %1189 = vst [vmem:[#allocation3 + $0xd0] sm:$0xff] %v1141
  %1190 = vst [vmem:[#allocation3 + $0xd8] sm:$0xff] %v1142
  %1191 = vst [vmem:[#allocation3 + $0xe0] sm:$0xff] %v1143
  %1192 = vst [vmem:[#allocation3 + $0xe8] sm:$0xff] %v1144
  %1193 = vst [vmem:[#allocation3 + $0xf0] sm:$0xff] %v1145
  %1194 = vst [vmem:[#allocation3 + $0xf8] sm:$0xff] %v1146
  %1195 = vst [vmem:[#allocation3 + $0x100] sm:$0xff] %v1147
  %1196 = vst [vmem:[#allocation3 + $0x108] sm:$0xff] %v1148
  %1197 = vst [vmem:[#allocation3 + $0x110] sm:$0xff] %v1149
  %1198 = vst [vmem:[#allocation3 + $0x118] sm:$0xff] %v1150
  %1199 = vst [vmem:[#allocation3 + $0x120] sm:$0xff] %v1151
  %1200 = vst [vmem:[#allocation3 + $0x128] sm:$0xff] %v1152
  %1201 = vst [vmem:[#allocation3 + $0x130] sm:$0xff] %v1153
  %1202 = vst [vmem:[#allocation3 + $0x138] sm:$0xff] %v1154
  %1203 = vst [vmem:[#allocation3 + $0x140] sm:$0xff] %v1155
  %1204 = vst [vmem:[#allocation3 + $0x148] sm:$0xff] %v1156
  %1205 = vst [vmem:[#allocation3 + $0x150] sm:$0xff] %v1157
  %1206 = vst [vmem:[#allocation3 + $0x158] sm:$0xff] %v1158
  %1207 = vst [vmem:[#allocation3 + $0x160] sm:$0xff] %v1159
  %1208 = vst [vmem:[#allocation3 + $0x168] sm:$0xff] %v1160
  %1209 = vst [vmem:[#allocation3 + $0x170] sm:$0xff] %v1161
  %1210 = vst [vmem:[#allocation3 + $0x178] sm:$0xff] %v1162
  %1211 = vst [vmem:[#allocation3 + $0x180] sm:$0xff] %v1163
  %1212 = vst [vmem:[#allocation3 + $0x188] sm:$0xff] %v1164
  %1213 = vst [vmem:[#allocation3 + $0x190] sm:$0xff] %v1165
  %1214 = vst [vmem:[#allocation3 + $0x198] sm:$0xff] %v1166
  %1215 = vst [vmem:[#allocation3 + $0x1a0] sm:$0xff] %v1167
  %1216 = vst [vmem:[#allocation3 + $0x1a8] sm:$0xff] %v1168
  %1217 = vst [vmem:[#allocation3 + $0x1b0] sm:$0xff] %v1169
  %1218 = vst [vmem:[#allocation3 + $0x1b8] sm:$0xff] %v1170
  %1219 = vst [vmem:[#allocation3 + $0x1c0] sm:$0xff] %v1171
  %1220 = vst [vmem:[#allocation3 + $0x1c8] sm:$0xff] %v1172
  %1221 = vst [vmem:[#allocation3 + $0x1d0] sm:$0xff] %v1173
  %1222 = vst [vmem:[#allocation3 + $0x1d8] sm:$0xff] %v1174
  %1223 = vst [vmem:[#allocation3 + $0x1e0] sm:$0xff] %v1175
  %1224 = vst [vmem:[#allocation3 + $0x1e8] sm:$0xff] %v1176
  %1225 = vst [vmem:[#allocation3 + $0x1f0] sm:$0xff] %v1177
  %1226 = vst [vmem:[#allocation3 + $0x1f8] sm:$0xff] %v1178
  %v1227 = vld [vmem:[#allocation2 + $0x10] sm:$0xf]
  %v1228 = vld [vmem:[#allocation2 + $0x18] sm:$0xf]
  %v1229 = vld [vmem:[#allocation2 + $0x20] sm:$0xf]
  %v1230 = vld [vmem:[#allocation2 + $0x28] sm:$0xf]
  %v1231 = vld [vmem:[#allocation2 + $0x30] sm:$0xf]
  %v1232 = vld [vmem:[#allocation2 + $0x38] sm:$0xf]
  %1233 = vst [vmem:[#allocation3] sm:$0xf] %v1227
  %1234 = vst [vmem:[#allocation3 + $0x8] sm:$0xf] %v1228
  %1235 = vst [vmem:[#allocation3 + $0x10] sm:$0xf] %v1229
  %1236 = vst [vmem:[#allocation3 + $0x18] sm:$0xf] %v1230
  %1237 = vst [vmem:[#allocation3 + $0x20] sm:$0xf] %v1231
  %1238 = vst [vmem:[#allocation3 + $0x28] sm:$0xf] %v1232
  %1239 = vst [vmem:[#allocation3 + $0x30] sm:$0xf] 0.0
  %1240 = vst [vmem:[#allocation3 + $0x38] sm:$0xf] 0.0
  %v1241 = vld [vmem:[#allocation2] sm:$0xf0]
  %v1242 = vld [vmem:[#allocation2 + $0x8] sm:$0xf0]
  %v1243 = vld [vmem:[#allocation2 + $0x10] sm:$0xf0]
  %v1244 = vld [vmem:[#allocation2 + $0x18] sm:$0xf0]
  %v1245 = vld [vmem:[#allocation2 + $0x20] sm:$0xf0]
  %v1246 = vld [vmem:[#allocation2 + $0x28] sm:$0xf0]
  %1247 = vst [vmem:[#allocation3 + $0x10] sm:$0xf0] %v1241
  %1248 = vst [vmem:[#allocation3 + $0x18] sm:$0xf0] %v1242
  %1249 = vst [vmem:[#allocation3 + $0x20] sm:$0xf0] %v1243
  %1250 = vst [vmem:[#allocation3 + $0x28] sm:$0xf0] %v1244
  %1251 = vst [vmem:[#allocation3 + $0x30] sm:$0xf0] %v1245
  %1252 = vst [vmem:[#allocation3 + $0x38] sm:$0xf0] %v1246
  %1253 = vst [vmem:[#allocation3] sm:$0xf0] 0.0
  %1254 = vst [vmem:[#allocation3 + $0x8] sm:$0xf0] 0.0
  %v1255 = vld [vmem:[#allocation2 + $0x50] sm:$0xf]
  %v1256 = vld [vmem:[#allocation2 + $0x58] sm:$0xf]
  %v1257 = vld [vmem:[#allocation2 + $0x60] sm:$0xf]
  %v1258 = vld [vmem:[#allocation2 + $0x68] sm:$0xf]
  %v1259 = vld [vmem:[#allocation2 + $0x70] sm:$0xf]
  %v1260 = vld [vmem:[#allocation2 + $0x78] sm:$0xf]
  %1261 = vst [vmem:[#allocation3 + $0x40] sm:$0xf] %v1255
  %1262 = vst [vmem:[#allocation3 + $0x48] sm:$0xf] %v1256
  %1263 = vst [vmem:[#allocation3 + $0x50] sm:$0xf] %v1257
  %1264 = vst [vmem:[#allocation3 + $0x58] sm:$0xf] %v1258
  %1265 = vst [vmem:[#allocation3 + $0x60] sm:$0xf] %v1259
  %1266 = vst [vmem:[#allocation3 + $0x68] sm:$0xf] %v1260
  %1267 = vst [vmem:[#allocation3 + $0x70] sm:$0xf] 0.0
  %1268 = vst [vmem:[#allocation3 + $0x78] sm:$0xf] 0.0
  %v1269 = vld [vmem:[#allocation2 + $0x40] sm:$0xf0]
  %v1270 = vld [vmem:[#allocation2 + $0x48] sm:$0xf0]
  %v1271 = vld [vmem:[#allocation2 + $0x50] sm:$0xf0]
  %v1272 = vld [vmem:[#allocation2 + $0x58] sm:$0xf0]
  %v1273 = vld [vmem:[#allocation2 + $0x60] sm:$0xf0]
  %v1274 = vld [vmem:[#allocation2 + $0x68] sm:$0xf0]
  %1275 = vst [vmem:[#allocation3 + $0x50] sm:$0xf0] %v1269
  %1276 = vst [vmem:[#allocation3 + $0x58] sm:$0xf0] %v1270
  %1277 = vst [vmem:[#allocation3 + $0x60] sm:$0xf0] %v1271
  %1278 = vst [vmem:[#allocation3 + $0x68] sm:$0xf0] %v1272
  %1279 = vst [vmem:[#allocation3 + $0x70] sm:$0xf0] %v1273
  %1280 = vst [vmem:[#allocation3 + $0x78] sm:$0xf0] %v1274
  %1281 = vst [vmem:[#allocation3 + $0x40] sm:$0xf0] 0.0
  %1282 = vst [vmem:[#allocation3 + $0x48] sm:$0xf0] 0.0
  %v1283 = vld [vmem:[%s3] sm:$0xff]
  %v1284 = vld [vmem:[%s3 + $0x8] sm:$0xff]
  %v1285 = vld [vmem:[%s3 + $0x10] sm:$0xff]
  %v1286 = vld [vmem:[%s3 + $0x18] sm:$0xff]
  %v1287 = vld [vmem:[#allocation3] sm:$0xff]
  %v1288 = vld [vmem:[#allocation3 + $0x8] sm:$0xff]
  %v1289 = vld [vmem:[#allocation3 + $0x10] sm:$0xff]
  %v1290 = vld [vmem:[#allocation3 + $0x18] sm:$0xff]
  %v1291 = vld [vmem:[#allocation3 + $0x20] sm:$0xff]
  %v1292 = vld [vmem:[#allocation3 + $0x28] sm:$0xff]
  %v1293 = vld [vmem:[#allocation3 + $0x30] sm:$0xff]
  %v1294 = vld [vmem:[#allocation3 + $0x38] sm:$0xff]
  %v1295 = vld [vmem:[#allocation3 + $0x40] sm:$0xff]
  %v1296 = vld [vmem:[#allocation3 + $0x48] sm:$0xff]
  %v1297 = vld [vmem:[#allocation3 + $0x50] sm:$0xff]
  %v1298 = vld [vmem:[#allocation3 + $0x58] sm:$0xff]
  %v1299 = vld [vmem:[#allocation3 + $0x60] sm:$0xff]
  %v1300 = vld [vmem:[#allocation3 + $0x68] sm:$0xff]
  %v1301 = vld [vmem:[#allocation3 + $0x70] sm:$0xff]
  %v1302 = vld [vmem:[#allocation3 + $0x78] sm:$0xff]
  %v1303 = vld [vmem:[#allocation3 + $0x80] sm:$0xff]
  %v1304 = vld [vmem:[#allocation3 + $0x88] sm:$0xff]
  %v1305 = vld [vmem:[#allocation3 + $0x90] sm:$0xff]
  %v1306 = vld [vmem:[#allocation3 + $0x98] sm:$0xff]
  %v1307 = vld [vmem:[#allocation3 + $0xa0] sm:$0xff]
  %v1308 = vld [vmem:[#allocation3 + $0xa8] sm:$0xff]
  %v1309 = vld [vmem:[#allocation3 + $0xb0] sm:$0xff]
  %v1310 = vld [vmem:[#allocation3 + $0xb8] sm:$0xff]
  %v1311 = vld [vmem:[#allocation3 + $0xc0] sm:$0xff]
  %v1312 = vld [vmem:[#allocation3 + $0xc8] sm:$0xff]
  %v1313 = vld [vmem:[#allocation3 + $0xd0] sm:$0xff]
  %v1314 = vld [vmem:[#allocation3 + $0xd8] sm:$0xff]
  %v1315 = vld [vmem:[#allocation3 + $0xe0] sm:$0xff]
  %v1316 = vld [vmem:[#allocation3 + $0xe8] sm:$0xff]
  %v1317 = vld [vmem:[#allocation3 + $0xf0] sm:$0xff]
  %v1318 = vld [vmem:[#allocation3 + $0xf8] sm:$0xff]
  %v1319 = vld [vmem:[#allocation3 + $0x100] sm:$0xff]
  %v1320 = vld [vmem:[#allocation3 + $0x108] sm:$0xff]
  %v1321 = vld [vmem:[#allocation3 + $0x110] sm:$0xff]
  %v1322 = vld [vmem:[#allocation3 + $0x118] sm:$0xff]
  %v1323 = vld [vmem:[#allocation3 + $0x120] sm:$0xff]
  %v1324 = vld [vmem:[#allocation3 + $0x128] sm:$0xff]
  %v1325 = vld [vmem:[#allocation3 + $0x130] sm:$0xff]
  %v1326 = vld [vmem:[#allocation3 + $0x138] sm:$0xff]
  %v1327 = vld [vmem:[#allocation3 + $0x140] sm:$0xff]
  %v1328 = vld [vmem:[#allocation3 + $0x148] sm:$0xff]
  %v1329 = vld [vmem:[#allocation3 + $0x150] sm:$0xff]
  %v1330 = vld [vmem:[#allocation3 + $0x158] sm:$0xff]
  %v1331 = vld [vmem:[#allocation3 + $0x160] sm:$0xff]
  %v1332 = vld [vmem:[#allocation3 + $0x168] sm:$0xff]
  %v1333 = vld [vmem:[#allocation3 + $0x170] sm:$0xff]
  %v1334 = vld [vmem:[#allocation3 + $0x178] sm:$0xff]
  %v1335 = vld [vmem:[#allocation3 + $0x180] sm:$0xff]
  %v1336 = vld [vmem:[#allocation3 + $0x188] sm:$0xff]
  %v1337 = vld [vmem:[#allocation3 + $0x190] sm:$0xff]
  %v1338 = vld [vmem:[#allocation3 + $0x198] sm:$0xff]
  %v1339 = vld [vmem:[#allocation3 + $0x1a0] sm:$0xff]
  %v1340 = vld [vmem:[#allocation3 + $0x1a8] sm:$0xff]
  %v1341 = vld [vmem:[#allocation3 + $0x1b0] sm:$0xff]
  %v1342 = vld [vmem:[#allocation3 + $0x1b8] sm:$0xff]
  %v1343 = vld [vmem:[#allocation3 + $0x1c0] sm:$0xff]
  %v1344 = vld [vmem:[#allocation3 + $0x1c8] sm:$0xff]
  %v1345 = vld [vmem:[#allocation3 + $0x1d0] sm:$0xff]
  %v1346 = vld [vmem:[#allocation3 + $0x1d8] sm:$0xff]
  %v1347 = vld [vmem:[#allocation3 + $0x1e0] sm:$0xff]
  %v1348 = vld [vmem:[#allocation3 + $0x1e8] sm:$0xff]
  %v1349 = vld [vmem:[#allocation3 + $0x1f0] sm:$0xff]
  %v1350 = vld [vmem:[#allocation3 + $0x1f8] sm:$0xff]
  %vm1351 = vcmask 261120
  %v1353 = vsel %vm1351, %v1283, 0
  %v1356 = vsel %vm1351, %v1284, 0
  %v1359 = vsel %vm1351, %v1285, 0
  %v1362 = vsel %vm1351, %v1286, 0
  %1364 = vmatprep.subr.mxu0 %v1288
  %1365 = vmatpush1.msra.mxu0 %v1287
  %1366 = vmatprep.subr.mxu0 %v1304
  %1367 = vmatpush1.msra.mxu0 %v1303
  %1368 = vmatprep.subr.mxu0 %v1320
  %1369 = vmatpush1.msra.mxu0 %v1319
  %1370 = vmatprep.subr.mxu0 %v1336
  %1371 = vmatpush1.msra.mxu0 %v1335
  %1372 = vmatprep.subr.mxu0 0.0
  %1373 = vmatpush1.msra.mxu0 0.0
  %1374 = vmatprep.subr.mxu0 0.0
  %1375 = vmatpush1.msra.mxu0 0.0
  %1376 = vmatprep.subr.mxu0 0.0
  %1377 = vmatpush1.msra.mxu0 0.0
  %1378 = vmatprep.subr.mxu0 0.0
  %1379 = vmatpush1.msra.mxu0 0.0
  %1380 = vmatprep.subr.mxu0 0.0
  %1381 = vmatpush1.msra.mxu0 0.0
  %1382 = vmatprep.subr.mxu0 0.0
  %1383 = vmatpush1.msra.mxu0 0.0
  %1384 = vmatprep.subr.mxu0 0.0
  %1385 = vmatpush1.msra.mxu0 0.0
  %1386 = vmatprep.subr.mxu0 0.0
  %1387 = vmatpush1.msra.mxu0 0.0
  %1388 = vmatprep.subr.mxu0 0.0
  %1389 = vmatpush1.msra.mxu0 0.0
  %1390 = vmatprep.subr.mxu0 0.0
  %1391 = vmatpush1.msra.mxu0 0.0
  %1392 = vmatprep.subr.mxu0 0.0
  %1393 = vmatpush1.msra.mxu0 0.0
  %1394 = vmatprep.subr.mxu0 0.0
  %1395 = vmatpush1.msra.mxu0 0.0
  %1396 = vmatprep.subr.mxu0 0.0
  %1397 = vmatpush1.msra.mxu0 0.0
  %1398 = vmatprep.subr.mxu0 0.0
  %1399 = vmatpush1.msra.mxu0 0.0
  %1400 = vmatprep.subr.mxu0 0.0
  %1401 = vmatpush1.msra.mxu0 0.0
  %1402 = vmatprep.subr.mxu0 0.0
  %1403 = vmatpush1.msra.mxu0 0.0
  %1404 = vmatprep.subr.mxu0 0.0
  %1405 = vmatpush1.msra.mxu0 0.0
  %1406 = vmatprep.subr.mxu0 0.0
  %1407 = vmatpush1.msra.mxu0 0.0
  %1408 = vmatprep.subr.mxu0 0.0
  %1409 = vmatpush1.msra.mxu0 0.0
  %1410 = vmatprep.subr.mxu0 0.0
  %1411 = vmatpush1.msra.mxu0 0.0
  %1412 = vmatprep.subr.mxu0 0.0
  %1413 = vmatpush1.msra.mxu0 0.0
  %1414 = vmatprep.subr.mxu0 0.0
  %1415 = vmatpush1.msra.mxu0 0.0
  %1416 = vmatprep.subr.mxu0 0.0
  %1417 = vmatpush1.msra.mxu0 0.0
  %1418 = vmatprep.subr.mxu0 0.0
  %1419 = vmatpush1.msra.mxu0 0.0
  %1420 = vmatprep.subr.mxu0 0.0
  %1421 = vmatpush1.msra.mxu0 0.0
  %1422 = vmatprep.subr.mxu0 0.0
  %1423 = vmatpush1.msra.mxu0 0.0
  %1424 = vmatprep.subr.mxu0 0.0
  %1425 = vmatpush1.msra.mxu0 0.0
  %1426 = vmatprep.subr.mxu0 0.0
  %1427 = vmatpush1.msra.mxu0 0.0
  %1428 = vmatprep.mubr.f32.mxu0 0.0
  %1429 = vmatmul.mubr.f32.gmra.mrb[0].mxu0 %v1353
  %v1430 = vpop.f32.mrb[0].mxu0
  %v1431 = vadd.f32 0.0, %v1430
  %v1432 = vpop.f32.mrb[0].mxu0
  %v1433 = vadd.f32 0.0, %v1432
  %1434 = vmatprep.mubr.f32.mxu0 0.0
  %1435 = vmatmul.mubr.f32.gmra.mrb[0].mxu0 %v1356
  %v1436 = vpop.f32.mrb[0].mxu0
  %v1437 = vadd.f32 0.0, %v1436
  %v1438 = vpop.f32.mrb[0].mxu0
  %v1439 = vadd.f32 0.0, %v1438
  %1440 = vmatprep.mubr.f32.mxu0 0.0
  %1441 = vmatmul.mubr.f32.gmra.mrb[0].mxu0 %v1359
  %v1442 = vpop.f32.mrb[0].mxu0
  %v1443 = vadd.f32 0.0, %v1442
  %v1444 = vpop.f32.mrb[0].mxu0
  %v1445 = vadd.f32 0.0, %v1444
  %1446 = vmatprep.mubr.f32.mxu0 0.0
  %1447 = vmatmul.mubr.f32.gmra.mrb[0].mxu0 %v1362
  %v1448 = vpop.f32.mrb[0].mxu0
  %v1449 = vadd.f32 0.0, %v1448
  %v1450 = vpop.f32.mrb[0].mxu0
  %v1451 = vadd.f32 0.0, %v1450
  %1452 = vdwg.mxu0
  %1453 = vmatprep.subr.mxu0 %v1290
  %1454 = vmatpush1.msra.mxu0 %v1289
  %1455 = vmatprep.subr.mxu0 %v1306
  %1456 = vmatpush1.msra.mxu0 %v1305
  %1457 = vmatprep.subr.mxu0 %v1322
  %1458 = vmatpush1.msra.mxu0 %v1321
  %1459 = vmatprep.subr.mxu0 %v1338
  %1460 = vmatpush1.msra.mxu0 %v1337
  %1461 = vmatprep.subr.mxu0 0.0
  %1462 = vmatpush1.msra.mxu0 0.0
  %1463 = vmatprep.subr.mxu0 0.0
  %1464 = vmatpush1.msra.mxu0 0.0
  %1465 = vmatprep.subr.mxu0 0.0
  %1466 = vmatpush1.msra.mxu0 0.0
  %1467 = vmatprep.subr.mxu0 0.0
  %1468 = vmatpush1.msra.mxu0 0.0
  %1469 = vmatprep.subr.mxu0 0.0
  %1470 = vmatpush1.msra.mxu0 0.0
  %1471 = vmatprep.subr.mxu0 0.0
  %1472 = vmatpush1.msra.mxu0 0.0
  %1473 = vmatprep.subr.mxu0 0.0
  %1474 = vmatpush1.msra.mxu0 0.0
  %1475 = vmatprep.subr.mxu0 0.0
  %1476 = vmatpush1.msra.mxu0 0.0
  %1477 = vmatprep.subr.mxu0 0.0
  %1478 = vmatpush1.msra.mxu0 0.0
  %1479 = vmatprep.subr.mxu0 0.0
  %1480 = vmatpush1.msra.mxu0 0.0
  %1481 = vmatprep.subr.mxu0 0.0
  %1482 = vmatpush1.msra.mxu0 0.0
  %1483 = vmatprep.subr.mxu0 0.0
  %1484 = vmatpush1.msra.mxu0 0.0
  %1485 = vmatprep.subr.mxu0 0.0
  %1486 = vmatpush1.msra.mxu0 0.0
  %1487 = vmatprep.subr.mxu0 0.0
  %1488 = vmatpush1.msra.mxu0 0.0
  %1489 = vmatprep.subr.mxu0 0.0
  %1490 = vmatpush1.msra.mxu0 0.0
  %1491 = vmatprep.subr.mxu0 0.0
  %1492 = vmatpush1.msra.mxu0 0.0
  %1493 = vmatprep.subr.mxu0 0.0
  %1494 = vmatpush1.msra.mxu0 0.0
  %1495 = vmatprep.subr.mxu0 0.0
  %1496 = vmatpush1.msra.mxu0 0.0
  %1497 = vmatprep.subr.mxu0 0.0
  %1498 = vmatpush1.msra.mxu0 0.0
  %1499 = vmatprep.subr.mxu0 0.0
  %1500 = vmatpush1.msra.mxu0 0.0
  %1501 = vmatprep.subr.mxu0 0.0
  %1502 = vmatpush1.msra.mxu0 0.0
  %1503 = vmatprep.subr.mxu0 0.0
  %1504 = vmatpush1.msra.mxu0 0.0
  %1505 = vmatprep.subr.mxu0 0.0
  %1506 = vmatpush1.msra.mxu0 0.0
  %1507 = vmatprep.subr.mxu0 0.0
  %1508 = vmatpush1.msra.mxu0 0.0
  %1509 = vmatprep.subr.mxu0 0.0
  %1510 = vmatpush1.msra.mxu0 0.0
  %1511 = vmatprep.subr.mxu0 0.0
  %1512 = vmatpush1.msra.mxu0 0.0
  %1513 = vmatprep.subr.mxu0 0.0
  %1514 = vmatpush1.msra.mxu0 0.0
  %1515 = vmatprep.subr.mxu0 0.0
  %1516 = vmatpush1.msra.mxu0 0.0
  %1517 = vmatprep.mubr.f32.mxu0 0.0
  %1518 = vmatmul.mubr.f32.gmra.mrb[0].mxu0 %v1353
  %v1519 = vpop.f32.mrb[0].mxu0
  %v1520 = vadd.f32 0.0, %v1519
  %v1521 = vpop.f32.mrb[0].mxu0
  %v1522 = vadd.f32 0.0, %v1521
  %1523 = vmatprep.mubr.f32.mxu0 0.0
  %1524 = vmatmul.mubr.f32.gmra.mrb[0].mxu0 %v1356
  %v1525 = vpop.f32.mrb[0].mxu0
  %v1526 = vadd.f32 0.0, %v1525
  %v1527 = vpop.f32.mrb[0].mxu0
  %v1528 = vadd.f32 0.0, %v1527
  %1529 = vmatprep.mubr.f32.mxu0 0.0
  %1530 = vmatmul.mubr.f32.gmra.mrb[0].mxu0 %v1359
  %v1531 = vpop.f32.mrb[0].mxu0
  %v1532 = vadd.f32 0.0, %v1531
  %v1533 = vpop.f32.mrb[0].mxu0
  %v1534 = vadd.f32 0.0, %v1533
  %1535 = vmatprep.mubr.f32.mxu0 0.0
  %1536 = vmatmul.mubr.f32.gmra.mrb[0].mxu0 %v1362
  %v1537 = vpop.f32.mrb[0].mxu0
  %v1538 = vadd.f32 0.0, %v1537
  %v1539 = vpop.f32.mrb[0].mxu0
  %v1540 = vadd.f32 0.0, %v1539
  %1541 = vdwg.mxu0
  %1542 = vmatprep.subr.mxu0 %v1292
  %1543 = vmatpush1.msra.mxu0 %v1291
  %1544 = vmatprep.subr.mxu0 %v1308
  %1545 = vmatpush1.msra.mxu0 %v1307
  %1546 = vmatprep.subr.mxu0 %v1324
  %1547 = vmatpush1.msra.mxu0 %v1323
  %1548 = vmatprep.subr.mxu0 %v1340
  %1549 = vmatpush1.msra.mxu0 %v1339
  %1550 = vmatprep.subr.mxu0 0.0
  %1551 = vmatpush1.msra.mxu0 0.0
  %1552 = vmatprep.subr.mxu0 0.0
  %1553 = vmatpush1.msra.mxu0 0.0
  %1554 = vmatprep.subr.mxu0 0.0
  %1555 = vmatpush1.msra.mxu0 0.0
  %1556 = vmatprep.subr.mxu0 0.0
  %1557 = vmatpush1.msra.mxu0 0.0
  %1558 = vmatprep.subr.mxu0 0.0
  %1559 = vmatpush1.msra.mxu0 0.0
  %1560 = vmatprep.subr.mxu0 0.0
  %1561 = vmatpush1.msra.mxu0 0.0
  %1562 = vmatprep.subr.mxu0 0.0
  %1563 = vmatpush1.msra.mxu0 0.0
  %1564 = vmatprep.subr.mxu0 0.0
  %1565 = vmatpush1.msra.mxu0 0.0
  %1566 = vmatprep.subr.mxu0 0.0
  %1567 = vmatpush1.msra.mxu0 0.0
  %1568 = vmatprep.subr.mxu0 0.0
  %1569 = vmatpush1.msra.mxu0 0.0
  %1570 = vmatprep.subr.mxu0 0.0
  %1571 = vmatpush1.msra.mxu0 0.0
  %1572 = vmatprep.subr.mxu0 0.0
  %1573 = vmatpush1.msra.mxu0 0.0
  %1574 = vmatprep.subr.mxu0 0.0
  %1575 = vmatpush1.msra.mxu0 0.0
  %1576 = vmatprep.subr.mxu0 0.0
  %1577 = vmatpush1.msra.mxu0 0.0
  %1578 = vmatprep.subr.mxu0 0.0
  %1579 = vmatpush1.msra.mxu0 0.0
  %1580 = vmatprep.subr.mxu0 0.0
  %1581 = vmatpush1.msra.mxu0 0.0
  %1582 = vmatprep.subr.mxu0 0.0
  %1583 = vmatpush1.msra.mxu0 0.0
  %1584 = vmatprep.subr.mxu0 0.0
  %1585 = vmatpush1.msra.mxu0 0.0
  %1586 = vmatprep.subr.mxu0 0.0
  %1587 = vmatpush1.msra.mxu0 0.0
  %1588 = vmatprep.subr.mxu0 0.0
  %1589 = vmatpush1.msra.mxu0 0.0
  %1590 = vmatprep.subr.mxu0 0.0
  %1591 = vmatpush1.msra.mxu0 0.0
  %1592 = vmatprep.subr.mxu0 0.0
  %1593 = vmatpush1.msra.mxu0 0.0
  %1594 = vmatprep.subr.mxu0 0.0
  %1595 = vmatpush1.msra.mxu0 0.0
  %1596 = vmatprep.subr.mxu0 0.0
  %1597 = vmatpush1.msra.mxu0 0.0
  %1598 = vmatprep.subr.mxu0 0.0
  %1599 = vmatpush1.msra.mxu0 0.0
  %1600 = vmatprep.subr.mxu0 0.0
  %1601 = vmatpush1.msra.mxu0 0.0
  %1602 = vmatprep.subr.mxu0 0.0
  %1603 = vmatpush1.msra.mxu0 0.0
  %1604 = vmatprep.subr.mxu0 0.0
  %1605 = vmatpush1.msra.mxu0 0.0
  %1606 = vmatprep.mubr.f32.mxu0 0.0
  %1607 = vmatmul.mubr.f32.gmra.mrb[0].mxu0 %v1353
  %v1608 = vpop.f32.mrb[0].mxu0
  %v1609 = vadd.f32 0.0, %v1608
  %v1610 = vpop.f32.mrb[0].mxu0
  %v1611 = vadd.f32 0.0, %v1610
  %1612 = vmatprep.mubr.f32.mxu0 0.0
  %1613 = vmatmul.mubr.f32.gmra.mrb[0].mxu0 %v1356
  %v1614 = vpop.f32.mrb[0].mxu0
  %v1615 = vadd.f32 0.0, %v1614
  %v1616 = vpop.f32.mrb[0].mxu0
  %v1617 = vadd.f32 0.0, %v1616
  %1618 = vmatprep.mubr.f32.mxu0 0.0
  %1619 = vmatmul.mubr.f32.gmra.mrb[0].mxu0 %v1359
  %v1620 = vpop.f32.mrb[0].mxu0
  %v1621 = vadd.f32 0.0, %v1620
  %v1622 = vpop.f32.mrb[0].mxu0
  %v1623 = vadd.f32 0.0, %v1622
  %1624 = vmatprep.mubr.f32.mxu0 0.0
  %1625 = vmatmul.mubr.f32.gmra.mrb[0].mxu0 %v1362
  %v1626 = vpop.f32.mrb[0].mxu0
  %v1627 = vadd.f32 0.0, %v1626
  %v1628 = vpop.f32.mrb[0].mxu0
  %v1629 = vadd.f32 0.0, %v1628
  %1630 = vdwg.mxu0
  %1631 = vmatprep.subr.mxu0 %v1294
  %1632 = vmatpush1.msra.mxu0 %v1293
  %1633 = vmatprep.subr.mxu0 %v1310
  %1634 = vmatpush1.msra.mxu0 %v1309
  %1635 = vmatprep.subr.mxu0 %v1326
  %1636 = vmatpush1.msra.mxu0 %v1325
  %1637 = vmatprep.subr.mxu0 %v1342
  %1638 = vmatpush1.msra.mxu0 %v1341
  %1639 = vmatprep.subr.mxu0 0.0
  %1640 = vmatpush1.msra.mxu0 0.0
  %1641 = vmatprep.subr.mxu0 0.0
  %1642 = vmatpush1.msra.mxu0 0.0
  %1643 = vmatprep.subr.mxu0 0.0
  %1644 = vmatpush1.msra.mxu0 0.0
  %1645 = vmatprep.subr.mxu0 0.0
  %1646 = vmatpush1.msra.mxu0 0.0
  %1647 = vmatprep.subr.mxu0 0.0
  %1648 = vmatpush1.msra.mxu0 0.0
  %1649 = vmatprep.subr.mxu0 0.0
  %1650 = vmatpush1.msra.mxu0 0.0
  %1651 = vmatprep.subr.mxu0 0.0
  %1652 = vmatpush1.msra.mxu0 0.0
  %1653 = vmatprep.subr.mxu0 0.0
  %1654 = vmatpush1.msra.mxu0 0.0
  %1655 = vmatprep.subr.mxu0 0.0
  %1656 = vmatpush1.msra.mxu0 0.0
  %1657 = vmatprep.subr.mxu0 0.0
  %1658 = vmatpush1.msra.mxu0 0.0
  %1659 = vmatprep.subr.mxu0 0.0
  %1660 = vmatpush1.msra.mxu0 0.0
  %1661 = vmatprep.subr.mxu0 0.0
  %1662 = vmatpush1.msra.mxu0 0.0
  %1663 = vmatprep.subr.mxu0 0.0
  %1664 = vmatpush1.msra.mxu0 0.0
  %1665 = vmatprep.subr.mxu0 0.0
  %1666 = vmatpush1.msra.mxu0 0.0
  %1667 = vmatprep.subr.mxu0 0.0
  %1668 = vmatpush1.msra.mxu0 0.0
  %1669 = vmatprep.subr.mxu0 0.0
  %1670 = vmatpush1.msra.mxu0 0.0
  %1671 = vmatprep.subr.mxu0 0.0
  %1672 = vmatpush1.msra.mxu0 0.0
  %1673 = vmatprep.subr.mxu0 0.0
  %1674 = vmatpush1.msra.mxu0 0.0
  %1675 = vmatprep.subr.mxu0 0.0
  %1676 = vmatpush1.msra.mxu0 0.0
  %1677 = vmatprep.subr.mxu0 0.0
  %1678 = vmatpush1.msra.mxu0 0.0
  %1679 = vmatprep.subr.mxu0 0.0
  %1680 = vmatpush1.msra.mxu0 0.0
  %1681 = vmatprep.subr.mxu0 0.0
  %1682 = vmatpush1.msra.mxu0 0.0
  %1683 = vmatprep.subr.mxu0 0.0
  %1684 = vmatpush1.msra.mxu0 0.0
  %1685 = vmatprep.subr.mxu0 0.0
  %1686 = vmatpush1.msra.mxu0 0.0
  %1687 = vmatprep.subr.mxu0 0.0
  %1688 = vmatpush1.msra.mxu0 0.0
  %1689 = vmatprep.subr.mxu0 0.0
  %1690 = vmatpush1.msra.mxu0 0.0
  %1691 = vmatprep.subr.mxu0 0.0
  %1692 = vmatpush1.msra.mxu0 0.0
  %1693 = vmatprep.subr.mxu0 0.0
  %1694 = vmatpush1.msra.mxu0 0.0
  %1695 = vmatprep.mubr.f32.mxu0 0.0
  %1696 = vmatmul.mubr.f32.gmra.mrb[0].mxu0 %v1353
  %v1697 = vpop.f32.mrb[0].mxu0
  %v1698 = vadd.f32 0.0, %v1697
  %v1699 = vpop.f32.mrb[0].mxu0
  %v1700 = vadd.f32 0.0, %v1699
  %1701 = vmatprep.mubr.f32.mxu0 0.0
  %1702 = vmatmul.mubr.f32.gmra.mrb[0].mxu0 %v1356
  %v1703 = vpop.f32.mrb[0].mxu0
  %v1704 = vadd.f32 0.0, %v1703
  %v1705 = vpop.f32.mrb[0].mxu0
  %v1706 = vadd.f32 0.0, %v1705
  %1707 = vmatprep.mubr.f32.mxu0 0.0
  %1708 = vmatmul.mubr.f32.gmra.mrb[0].mxu0 %v1359
  %v1709 = vpop.f32.mrb[0].mxu0
  %v1710 = vadd.f32 0.0, %v1709
  %v1711 = vpop.f32.mrb[0].mxu0
  %v1712 = vadd.f32 0.0, %v1711
  %1713 = vmatprep.mubr.f32.mxu0 0.0
  %1714 = vmatmul.mubr.f32.gmra.mrb[0].mxu0 %v1362
  %v1715 = vpop.f32.mrb[0].mxu0
  %v1716 = vadd.f32 0.0, %v1715
  %v1717 = vpop.f32.mrb[0].mxu0
  %v1718 = vadd.f32 0.0, %v1717
  %1719 = vdwg.mxu0
  %1720 = vmatprep.subr.mxu0 %v1296
  %1721 = vmatpush1.msra.mxu0 %v1295
  %1722 = vmatprep.subr.mxu0 %v1312
  %1723 = vmatpush1.msra.mxu0 %v1311
  %1724 = vmatprep.subr.mxu0 %v1328
  %1725 = vmatpush1.msra.mxu0 %v1327
  %1726 = vmatprep.subr.mxu0 %v1344
  %1727 = vmatpush1.msra.mxu0 %v1343
  %1728 = vmatprep.subr.mxu0 0.0
  %1729 = vmatpush1.msra.mxu0 0.0
  %1730 = vmatprep.subr.mxu0 0.0
  %1731 = vmatpush1.msra.mxu0 0.0
  %1732 = vmatprep.subr.mxu0 0.0
  %1733 = vmatpush1.msra.mxu0 0.0
  %1734 = vmatprep.subr.mxu0 0.0
  %1735 = vmatpush1.msra.mxu0 0.0
  %1736 = vmatprep.subr.mxu0 0.0
  %1737 = vmatpush1.msra.mxu0 0.0
  %1738 = vmatprep.subr.mxu0 0.0
  %1739 = vmatpush1.msra.mxu0 0.0
  %1740 = vmatprep.subr.mxu0 0.0
  %1741 = vmatpush1.msra.mxu0 0.0
  %1742 = vmatprep.subr.mxu0 0.0
  %1743 = vmatpush1.msra.mxu0 0.0
  %1744 = vmatprep.subr.mxu0 0.0
  %1745 = vmatpush1.msra.mxu0 0.0
  %1746 = vmatprep.subr.mxu0 0.0
  %1747 = vmatpush1.msra.mxu0 0.0
  %1748 = vmatprep.subr.mxu0 0.0
  %1749 = vmatpush1.msra.mxu0 0.0
  %1750 = vmatprep.subr.mxu0 0.0
  %1751 = vmatpush1.msra.mxu0 0.0
  %1752 = vmatprep.subr.mxu0 0.0
  %1753 = vmatpush1.msra.mxu0 0.0
  %1754 = vmatprep.subr.mxu0 0.0
  %1755 = vmatpush1.msra.mxu0 0.0
  %1756 = vmatprep.subr.mxu0 0.0
  %1757 = vmatpush1.msra.mxu0 0.0
  %1758 = vmatprep.subr.mxu0 0.0
  %1759 = vmatpush1.msra.mxu0 0.0
  %1760 = vmatprep.subr.mxu0 0.0
  %1761 = vmatpush1.msra.mxu0 0.0
  %1762 = vmatprep.subr.mxu0 0.0
  %1763 = vmatpush1.msra.mxu0 0.0
  %1764 = vmatprep.subr.mxu0 0.0
  %1765 = vmatpush1.msra.mxu0 0.0
  %1766 = vmatprep.subr.mxu0 0.0
  %1767 = vmatpush1.msra.mxu0 0.0
  %1768 = vmatprep.subr.mxu0 0.0
  %1769 = vmatpush1.msra.mxu0 0.0
  %1770 = vmatprep.subr.mxu0 0.0
  %1771 = vmatpush1.msra.mxu0 0.0
  %1772 = vmatprep.subr.mxu0 0.0
  %1773 = vmatpush1.msra.mxu0 0.0
  %1774 = vmatprep.subr.mxu0 0.0
  %1775 = vmatpush1.msra.mxu0 0.0
  %1776 = vmatprep.subr.mxu0 0.0
  %1777 = vmatpush1.msra.mxu0 0.0
  %1778 = vmatprep.subr.mxu0 0.0
  %1779 = vmatpush1.msra.mxu0 0.0
  %1780 = vmatprep.subr.mxu0 0.0
  %1781 = vmatpush1.msra.mxu0 0.0
  %1782 = vmatprep.subr.mxu0 0.0
  %1783 = vmatpush1.msra.mxu0 0.0
  %1784 = vmatprep.mubr.f32.mxu0 0.0
  %1785 = vmatmul.mubr.f32.gmra.mrb[0].mxu0 %v1353
  %v1786 = vpop.f32.mrb[0].mxu0
  %v1787 = vadd.f32 0.0, %v1786
  %v1788 = vpop.f32.mrb[0].mxu0
  %v1789 = vadd.f32 0.0, %v1788
  %1790 = vmatprep.mubr.f32.mxu0 0.0
  %1791 = vmatmul.mubr.f32.gmra.mrb[0].mxu0 %v1356
  %v1792 = vpop.f32.mrb[0].mxu0
  %v1793 = vadd.f32 0.0, %v1792
  %v1794 = vpop.f32.mrb[0].mxu0
  %v1795 = vadd.f32 0.0, %v1794
  %1796 = vmatprep.mubr.f32.mxu0 0.0
  %1797 = vmatmul.mubr.f32.gmra.mrb[0].mxu0 %v1359
  %v1798 = vpop.f32.mrb[0].mxu0
  %v1799 = vadd.f32 0.0, %v1798
  %v1800 = vpop.f32.mrb[0].mxu0
  %v1801 = vadd.f32 0.0, %v1800
  %1802 = vmatprep.mubr.f32.mxu0 0.0
  %1803 = vmatmul.mubr.f32.gmra.mrb[0].mxu0 %v1362
  %v1804 = vpop.f32.mrb[0].mxu0
  %v1805 = vadd.f32 0.0, %v1804
  %v1806 = vpop.f32.mrb[0].mxu0
  %v1807 = vadd.f32 0.0, %v1806
  %1808 = vdwg.mxu0
  %1809 = vmatprep.subr.mxu0 %v1298
  %1810 = vmatpush1.msra.mxu0 %v1297
  %1811 = vmatprep.subr.mxu0 %v1314
  %1812 = vmatpush1.msra.mxu0 %v1313
  %1813 = vmatprep.subr.mxu0 %v1330
  %1814 = vmatpush1.msra.mxu0 %v1329
  %1815 = vmatprep.subr.mxu0 %v1346
  %1816 = vmatpush1.msra.mxu0 %v1345
  %1817 = vmatprep.subr.mxu0 0.0
  %1818 = vmatpush1.msra.mxu0 0.0
  %1819 = vmatprep.subr.mxu0 0.0
  %1820 = vmatpush1.msra.mxu0 0.0
  %1821 = vmatprep.subr.mxu0 0.0
  %1822 = vmatpush1.msra.mxu0 0.0
  %1823 = vmatprep.subr.mxu0 0.0
  %1824 = vmatpush1.msra.mxu0 0.0
  %1825 = vmatprep.subr.mxu0 0.0
  %1826 = vmatpush1.msra.mxu0 0.0
  %1827 = vmatprep.subr.mxu0 0.0
  %1828 = vmatpush1.msra.mxu0 0.0
  %1829 = vmatprep.subr.mxu0 0.0
  %1830 = vmatpush1.msra.mxu0 0.0
  %1831 = vmatprep.subr.mxu0 0.0
  %1832 = vmatpush1.msra.mxu0 0.0
  %1833 = vmatprep.subr.mxu0 0.0
  %1834 = vmatpush1.msra.mxu0 0.0
  %1835 = vmatprep.subr.mxu0 0.0
  %1836 = vmatpush1.msra.mxu0 0.0
  %1837 = vmatprep.subr.mxu0 0.0
  %1838 = vmatpush1.msra.mxu0 0.0
  %1839 = vmatprep.subr.mxu0 0.0
  %1840 = vmatpush1.msra.mxu0 0.0
  %1841 = vmatprep.subr.mxu0 0.0
  %1842 = vmatpush1.msra.mxu0 0.0
  %1843 = vmatprep.subr.mxu0 0.0
  %1844 = vmatpush1.msra.mxu0 0.0
  %1845 = vmatprep.subr.mxu0 0.0
  %1846 = vmatpush1.msra.mxu0 0.0
  %1847 = vmatprep.subr.mxu0 0.0
  %1848 = vmatpush1.msra.mxu0 0.0
  %1849 = vmatprep.subr.mxu0 0.0
  %1850 = vmatpush1.msra.mxu0 0.0
  %1851 = vmatprep.subr.mxu0 0.0
  %1852 = vmatpush1.msra.mxu0 0.0
  %1853 = vmatprep.subr.mxu0 0.0
  %1854 = vmatpush1.msra.mxu0 0.0
  %1855 = vmatprep.subr.mxu0 0.0
  %1856 = vmatpush1.msra.mxu0 0.0
  %1857 = vmatprep.subr.mxu0 0.0
  %1858 = vmatpush1.msra.mxu0 0.0
  %1859 = vmatprep.subr.mxu0 0.0
  %1860 = vmatpush1.msra.mxu0 0.0
  %1861 = vmatprep.subr.mxu0 0.0
  %1862 = vmatpush1.msra.mxu0 0.0
  %1863 = vmatprep.subr.mxu0 0.0
  %1864 = vmatpush1.msra.mxu0 0.0
  %1865 = vmatprep.subr.mxu0 0.0
  %1866 = vmatpush1.msra.mxu0 0.0
  %1867 = vmatprep.subr.mxu0 0.0
  %1868 = vmatpush1.msra.mxu0 0.0
  %1869 = vmatprep.subr.mxu0 0.0
  %1870 = vmatpush1.msra.mxu0 0.0
  %1871 = vmatprep.subr.mxu0 0.0
  %1872 = vmatpush1.msra.mxu0 0.0
  %1873 = vmatprep.mubr.f32.mxu0 0.0
  %1874 = vmatmul.mubr.f32.gmra.mrb[0].mxu0 %v1353
  %v1875 = vpop.f32.mrb[0].mxu0
  %v1876 = vadd.f32 0.0, %v1875
  %v1877 = vpop.f32.mrb[0].mxu0
  %v1878 = vadd.f32 0.0, %v1877
  %1879 = vmatprep.mubr.f32.mxu0 0.0
  %1880 = vmatmul.mubr.f32.gmra.mrb[0].mxu0 %v1356
  %v1881 = vpop.f32.mrb[0].mxu0
  %v1882 = vadd.f32 0.0, %v1881
  %v1883 = vpop.f32.mrb[0].mxu0
  %v1884 = vadd.f32 0.0, %v1883
  %1885 = vmatprep.mubr.f32.mxu0 0.0
  %1886 = vmatmul.mubr.f32.gmra.mrb[0].mxu0 %v1359
  %v1887 = vpop.f32.mrb[0].mxu0
  %v1888 = vadd.f32 0.0, %v1887
  %v1889 = vpop.f32.mrb[0].mxu0
  %v1890 = vadd.f32 0.0, %v1889
  %1891 = vmatprep.mubr.f32.mxu0 0.0
  %1892 = vmatmul.mubr.f32.gmra.mrb[0].mxu0 %v1362
  %v1893 = vpop.f32.mrb[0].mxu0
  %v1894 = vadd.f32 0.0, %v1893
  %v1895 = vpop.f32.mrb[0].mxu0
  %v1896 = vadd.f32 0.0, %v1895
  %1897 = vdwg.mxu0
  %1898 = vmatprep.subr.mxu0 %v1300
  %1899 = vmatpush1.msra.mxu0 %v1299
  %1900 = vmatprep.subr.mxu0 %v1316
  %1901 = vmatpush1.msra.mxu0 %v1315
  %1902 = vmatprep.subr.mxu0 %v1332
  %1903 = vmatpush1.msra.mxu0 %v1331
  %1904 = vmatprep.subr.mxu0 %v1348
  %1905 = vmatpush1.msra.mxu0 %v1347
  %1906 = vmatprep.subr.mxu0 0.0
  %1907 = vmatpush1.msra.mxu0 0.0
  %1908 = vmatprep.subr.mxu0 0.0
  %1909 = vmatpush1.msra.mxu0 0.0
  %1910 = vmatprep.subr.mxu0 0.0
  %1911 = vmatpush1.msra.mxu0 0.0
  %1912 = vmatprep.subr.mxu0 0.0
  %1913 = vmatpush1.msra.mxu0 0.0
  %1914 = vmatprep.subr.mxu0 0.0
  %1915 = vmatpush1.msra.mxu0 0.0
  %1916 = vmatprep.subr.mxu0 0.0
  %1917 = vmatpush1.msra.mxu0 0.0
  %1918 = vmatprep.subr.mxu0 0.0
  %1919 = vmatpush1.msra.mxu0 0.0
  %1920 = vmatprep.subr.mxu0 0.0
  %1921 = vmatpush1.msra.mxu0 0.0
  %1922 = vmatprep.subr.mxu0 0.0
  %1923 = vmatpush1.msra.mxu0 0.0
  %1924 = vmatprep.subr.mxu0 0.0
  %1925 = vmatpush1.msra.mxu0 0.0
  %1926 = vmatprep.subr.mxu0 0.0
  %1927 = vmatpush1.msra.mxu0 0.0
  %1928 = vmatprep.subr.mxu0 0.0
  %1929 = vmatpush1.msra.mxu0 0.0
  %1930 = vmatprep.subr.mxu0 0.0
  %1931 = vmatpush1.msra.mxu0 0.0
  %1932 = vmatprep.subr.mxu0 0.0
  %1933 = vmatpush1.msra.mxu0 0.0
  %1934 = vmatprep.subr.mxu0 0.0
  %1935 = vmatpush1.msra.mxu0 0.0
  %1936 = vmatprep.subr.mxu0 0.0
  %1937 = vmatpush1.msra.mxu0 0.0
  %1938 = vmatprep.subr.mxu0 0.0
  %1939 = vmatpush1.msra.mxu0 0.0
  %1940 = vmatprep.subr.mxu0 0.0
  %1941 = vmatpush1.msra.mxu0 0.0
  %1942 = vmatprep.subr.mxu0 0.0
  %1943 = vmatpush1.msra.mxu0 0.0
  %1944 = vmatprep.subr.mxu0 0.0
  %1945 = vmatpush1.msra.mxu0 0.0
  %1946 = vmatprep.subr.mxu0 0.0
  %1947 = vmatpush1.msra.mxu0 0.0
  %1948 = vmatprep.subr.mxu0 0.0
  %1949 = vmatpush1.msra.mxu0 0.0
  %1950 = vmatprep.subr.mxu0 0.0
  %1951 = vmatpush1.msra.mxu0 0.0
  %1952 = vmatprep.subr.mxu0 0.0
  %1953 = vmatpush1.msra.mxu0 0.0
  %1954 = vmatprep.subr.mxu0 0.0
  %1955 = vmatpush1.msra.mxu0 0.0
  %1956 = vmatprep.subr.mxu0 0.0
  %1957 = vmatpush1.msra.mxu0 0.0
  %1958 = vmatprep.subr.mxu0 0.0
  %1959 = vmatpush1.msra.mxu0 0.0
  %1960 = vmatprep.subr.mxu0 0.0
  %1961 = vmatpush1.msra.mxu0 0.0
  %1962 = vmatprep.mubr.f32.mxu0 0.0
  %1963 = vmatmul.mubr.f32.gmra.mrb[0].mxu0 %v1353
  %v1964 = vpop.f32.mrb[0].mxu0
  %v1965 = vadd.f32 0.0, %v1964
  %v1966 = vpop.f32.mrb[0].mxu0
  %v1967 = vadd.f32 0.0, %v1966
  %1968 = vmatprep.mubr.f32.mxu0 0.0
  %1969 = vmatmul.mubr.f32.gmra.mrb[0].mxu0 %v1356
  %v1970 = vpop.f32.mrb[0].mxu0
  %v1971 = vadd.f32 0.0, %v1970
  %v1972 = vpop.f32.mrb[0].mxu0
  %v1973 = vadd.f32 0.0, %v1972
  %1974 = vmatprep.mubr.f32.mxu0 0.0
  %1975 = vmatmul.mubr.f32.gmra.mrb[0].mxu0 %v1359
  %v1976 = vpop.f32.mrb[0].mxu0
  %v1977 = vadd.f32 0.0, %v1976
  %v1978 = vpop.f32.mrb[0].mxu0
  %v1979 = vadd.f32 0.0, %v1978
  %1980 = vmatprep.mubr.f32.mxu0 0.0
  %1981 = vmatmul.mubr.f32.gmra.mrb[0].mxu0 %v1362
  %v1982 = vpop.f32.mrb[0].mxu0
  %v1983 = vadd.f32 0.0, %v1982
  %v1984 = vpop.f32.mrb[0].mxu0
  %v1985 = vadd.f32 0.0, %v1984
  %1986 = vdwg.mxu0
  %1987 = vmatprep.subr.mxu0 %v1302
  %1988 = vmatpush1.msra.mxu0 %v1301
  %1989 = vmatprep.subr.mxu0 %v1318
  %1990 = vmatpush1.msra.mxu0 %v1317
  %1991 = vmatprep.subr.mxu0 %v1334
  %1992 = vmatpush1.msra.mxu0 %v1333
  %1993 = vmatprep.subr.mxu0 %v1350
  %1994 = vmatpush1.msra.mxu0 %v1349
  %1995 = vmatprep.subr.mxu0 0.0
  %1996 = vmatpush1.msra.mxu0 0.0
  %1997 = vmatprep.subr.mxu0 0.0
  %1998 = vmatpush1.msra.mxu0 0.0
  %1999 = vmatprep.subr.mxu0 0.0
  %2000 = vmatpush1.msra.mxu0 0.0
  %2001 = vmatprep.subr.mxu0 0.0
  %2002 = vmatpush1.msra.mxu0 0.0
  %2003 = vmatprep.subr.mxu0 0.0
  %2004 = vmatpush1.msra.mxu0 0.0
  %2005 = vmatprep.subr.mxu0 0.0
  %2006 = vmatpush1.msra.mxu0 0.0
  %2007 = vmatprep.subr.mxu0 0.0
  %2008 = vmatpush1.msra.mxu0 0.0
  %2009 = vmatprep.subr.mxu0 0.0
  %2010 = vmatpush1.msra.mxu0 0.0
  %2011 = vmatprep.subr.mxu0 0.0
  %2012 = vmatpush1.msra.mxu0 0.0
  %2013 = vmatprep.subr.mxu0 0.0
  %2014 = vmatpush1.msra.mxu0 0.0
  %2015 = vmatprep.subr.mxu0 0.0
  %2016 = vmatpush1.msra.mxu0 0.0
  %2017 = vmatprep.subr.mxu0 0.0
  %2018 = vmatpush1.msra.mxu0 0.0
  %2019 = vmatprep.subr.mxu0 0.0
  %2020 = vmatpush1.msra.mxu0 0.0
  %2021 = vmatprep.subr.mxu0 0.0
  %2022 = vmatpush1.msra.mxu0 0.0
  %2023 = vmatprep.subr.mxu0 0.0
  %2024 = vmatpush1.msra.mxu0 0.0
  %2025 = vmatprep.subr.mxu0 0.0
  %2026 = vmatpush1.msra.mxu0 0.0
  %2027 = vmatprep.subr.mxu0 0.0
  %2028 = vmatpush1.msra.mxu0 0.0
  %2029 = vmatprep.subr.mxu0 0.0
  %2030 = vmatpush1.msra.mxu0 0.0
  %2031 = vmatprep.subr.mxu0 0.0
  %2032 = vmatpush1.msra.mxu0 0.0
  %2033 = vmatprep.subr.mxu0 0.0
  %2034 = vmatpush1.msra.mxu0 0.0
  %2035 = vmatprep.subr.mxu0 0.0
  %2036 = vmatpush1.msra.mxu0 0.0
  %2037 = vmatprep.subr.mxu0 0.0
  %2038 = vmatpush1.msra.mxu0 0.0
  %2039 = vmatprep.subr.mxu0 0.0
  %2040 = vmatpush1.msra.mxu0 0.0
  %2041 = vmatprep.subr.mxu0 0.0
  %2042 = vmatpush1.msra.mxu0 0.0
  %2043 = vmatprep.subr.mxu0 0.0
  %2044 = vmatpush1.msra.mxu0 0.0
  %2045 = vmatprep.subr.mxu0 0.0
  %2046 = vmatpush1.msra.mxu0 0.0
  %2047 = vmatprep.subr.mxu0 0.0
  %2048 = vmatpush1.msra.mxu0 0.0
  %2049 = vmatprep.subr.mxu0 0.0
  %2050 = vmatpush1.msra.mxu0 0.0
  %2051 = vmatprep.mubr.f32.mxu0 0.0
  %2052 = vmatmul.mubr.f32.gmra.mrb[0].mxu0 %v1353
  %v2053 = vpop.f32.mrb[0].mxu0
  %v2054 = vadd.f32 0.0, %v2053
  %v2055 = vpop.f32.mrb[0].mxu0
  %v2056 = vadd.f32 0.0, %v2055
  %2057 = vmatprep.mubr.f32.mxu0 0.0
  %2058 = vmatmul.mubr.f32.gmra.mrb[0].mxu0 %v1356
  %v2059 = vpop.f32.mrb[0].mxu0
  %v2060 = vadd.f32 0.0, %v2059
  %v2061 = vpop.f32.mrb[0].mxu0
  %v2062 = vadd.f32 0.0, %v2061
  %2063 = vmatprep.mubr.f32.mxu0 0.0
  %2064 = vmatmul.mubr.f32.gmra.mrb[0].mxu0 %v1359
  %v2065 = vpop.f32.mrb[0].mxu0
  %v2066 = vadd.f32 0.0, %v2065
  %v2067 = vpop.f32.mrb[0].mxu0
  %v2068 = vadd.f32 0.0, %v2067
  %2069 = vmatprep.mubr.f32.mxu0 0.0
  %2070 = vmatmul.mubr.f32.gmra.mrb[0].mxu0 %v1362
  %v2071 = vpop.f32.mrb[0].mxu0
  %v2072 = vadd.f32 0.0, %v2071
  %v2073 = vpop.f32.mrb[0].mxu0
  %v2074 = vadd.f32 0.0, %v2073
  %2075 = vdwg.mxu0
  %v2076 = vld [vmem:[%s4] sm:$0xff]
  %v2077 = vld [vmem:[%s4 + $0x8] sm:$0xff]
  %v2078 = vld [vmem:[%s4 + $0x10] sm:$0xff]
  %v2079 = vld [vmem:[%s4 + $0x18] sm:$0xff]
  %2081 = vset.pattern.permute.xlu0 0
  %2082 = vperm.xlu0 %2081, %v2076
  %v2083 = vpop.permute.xlu0 %2082
  %2086 = vset.pattern.permute.xlu0 0
  %2087 = vperm.xlu0 %2086, %v2077
  %v2088 = vpop.permute.xlu0 %2087
  %2091 = vset.pattern.permute.xlu0 0
  %2092 = vperm.xlu0 %2091, %v2078
  %v2093 = vpop.permute.xlu0 %2092
  %2096 = vset.pattern.permute.xlu0 0
  %2097 = vperm.xlu0 %2096, %v2079
  %v2098 = vpop.permute.xlu0 %2097
  %v2100 = vadd.f32 %v1431, %v2083
  %v2101 = vadd.f32 %v1433, %v2083
  %v2102 = vadd.f32 %v1520, %v2083
  %v2103 = vadd.f32 %v1522, %v2083
  %v2104 = vadd.f32 %v1609, %v2083
  %v2105 = vadd.f32 %v1611, %v2083
  %v2106 = vadd.f32 %v1698, %v2083
  %v2107 = vadd.f32 %v1700, %v2083
  %v2108 = vadd.f32 %v1437, %v2088
  %v2109 = vadd.f32 %v1439, %v2088
  %v2110 = vadd.f32 %v1526, %v2088
  %v2111 = vadd.f32 %v1528, %v2088
  %v2112 = vadd.f32 %v1615, %v2088
  %v2113 = vadd.f32 %v1617, %v2088
  %v2114 = vadd.f32 %v1704, %v2088
  %v2115 = vadd.f32 %v1706, %v2088
  %v2116 = vadd.f32 %v1443, %v2093
  %v2117 = vadd.f32 %v1445, %v2093
  %v2118 = vadd.f32 %v1532, %v2093
  %v2119 = vadd.f32 %v1534, %v2093
  %v2120 = vadd.f32 %v1621, %v2093
  %v2121 = vadd.f32 %v1623, %v2093
  %v2122 = vadd.f32 %v1710, %v2093
  %v2123 = vadd.f32 %v1712, %v2093
  %v2124 = vadd.f32 %v1449, %v2098
  %v2125 = vadd.f32 %v1451, %v2098
  %v2126 = vadd.f32 %v1538, %v2098
  %v2127 = vadd.f32 %v1540, %v2098
  %v2128 = vadd.f32 %v1627, %v2098
  %v2129 = vadd.f32 %v1629, %v2098
  %v2130 = vadd.f32 %v1716, %v2098
  %v2131 = vadd.f32 %v1718, %v2098
  %v2132 = vld [vmem:[#allocation2] sm:$0xff]
  %v2133 = vld [vmem:[#allocation2 + $0x8] sm:$0xff]
  %v2134 = vld [vmem:[#allocation2 + $0x10] sm:$0xff]
  %v2135 = vld [vmem:[#allocation2 + $0x18] sm:$0xff]
  %v2136 = vld [vmem:[#allocation2 + $0x20] sm:$0xff]
  %v2137 = vld [vmem:[#allocation2 + $0x28] sm:$0xff]
  %v2138 = vld [vmem:[#allocation2 + $0x30] sm:$0xff]
  %v2139 = vld [vmem:[#allocation2 + $0x38] sm:$0xff]
  %v2140 = vld [vmem:[#allocation2 + $0x80] sm:$0xff]
  %v2141 = vld [vmem:[#allocation2 + $0x88] sm:$0xff]
  %v2142 = vld [vmem:[#allocation2 + $0x90] sm:$0xff]
  %v2143 = vld [vmem:[#allocation2 + $0x98] sm:$0xff]
  %v2144 = vld [vmem:[#allocation2 + $0xa0] sm:$0xff]
  %v2145 = vld [vmem:[#allocation2 + $0xa8] sm:$0xff]
  %v2146 = vld [vmem:[#allocation2 + $0xb0] sm:$0xff]
  %v2147 = vld [vmem:[#allocation2 + $0xb8] sm:$0xff]
  %v2148 = vld [vmem:[#allocation2 + $0x100] sm:$0xff]
  %v2149 = vld [vmem:[#allocation2 + $0x108] sm:$0xff]
  %v2150 = vld [vmem:[#allocation2 + $0x110] sm:$0xff]
  %v2151 = vld [vmem:[#allocation2 + $0x118] sm:$0xff]
  %v2152 = vld [vmem:[#allocation2 + $0x120] sm:$0xff]
  %v2153 = vld [vmem:[#allocation2 + $0x128] sm:$0xff]
  %v2154 = vld [vmem:[#allocation2 + $0x130] sm:$0xff]
  %v2155 = vld [vmem:[#allocation2 + $0x138] sm:$0xff]
  %v2156 = vld [vmem:[#allocation2 + $0x180] sm:$0xff]
  %v2157 = vld [vmem:[#allocation2 + $0x188] sm:$0xff]
  %v2158 = vld [vmem:[#allocation2 + $0x190] sm:$0xff]
  %v2159 = vld [vmem:[#allocation2 + $0x198] sm:$0xff]
  %v2160 = vld [vmem:[#allocation2 + $0x1a0] sm:$0xff]
  %v2161 = vld [vmem:[#allocation2 + $0x1a8] sm:$0xff]
  %v2162 = vld [vmem:[#allocation2 + $0x1b0] sm:$0xff]
  %v2163 = vld [vmem:[#allocation2 + $0x1b8] sm:$0xff]
  %v2164 = vadd.f32 %v2100, %v2132
  %v2165 = vadd.f32 %v2101, %v2133
  %v2166 = vadd.f32 %v2102, %v2134
  %v2167 = vadd.f32 %v2103, %v2135
  %v2168 = vadd.f32 %v2104, %v2136
  %v2169 = vadd.f32 %v2105, %v2137
  %v2170 = vadd.f32 %v2106, %v2138
  %v2171 = vadd.f32 %v2107, %v2139
  %v2172 = vadd.f32 %v2108, %v2140
  %v2173 = vadd.f32 %v2109, %v2141
  %v2174 = vadd.f32 %v2110, %v2142
  %v2175 = vadd.f32 %v2111, %v2143
  %v2176 = vadd.f32 %v2112, %v2144
  %v2177 = vadd.f32 %v2113, %v2145
  %v2178 = vadd.f32 %v2114, %v2146
  %v2179 = vadd.f32 %v2115, %v2147
  %v2180 = vadd.f32 %v2116, %v2148
  %v2181 = vadd.f32 %v2117, %v2149
  %v2182 = vadd.f32 %v2118, %v2150
  %v2183 = vadd.f32 %v2119, %v2151
  %v2184 = vadd.f32 %v2120, %v2152
  %v2185 = vadd.f32 %v2121, %v2153
  %v2186 = vadd.f32 %v2122, %v2154
  %v2187 = vadd.f32 %v2123, %v2155
  %v2188 = vadd.f32 %v2124, %v2156
  %v2189 = vadd.f32 %v2125, %v2157
  %v2190 = vadd.f32 %v2126, %v2158
  %v2191 = vadd.f32 %v2127, %v2159
  %v2192 = vadd.f32 %v2128, %v2160
  %v2193 = vadd.f32 %v2129, %v2161
  %v2194 = vadd.f32 %v2130, %v2162
  %v2195 = vadd.f32 %v2131, %v2163
  %v2196 = vmax.f32 %v2164, 0.0
  %v2197 = vmax.f32 %v2165, 0.0
  %v2198 = vmax.f32 %v2166, 0.0
  %v2199 = vmax.f32 %v2167, 0.0
  %v2200 = vmax.f32 %v2168, 0.0
  %v2201 = vmax.f32 %v2169, 0.0
  %v2202 = vmax.f32 %v2170, 0.0
  %v2203 = vmax.f32 %v2171, 0.0
  %v2204 = vmax.f32 %v2172, 0.0
  %v2205 = vmax.f32 %v2173, 0.0
  %v2206 = vmax.f32 %v2174, 0.0
  %v2207 = vmax.f32 %v2175, 0.0
  %v2208 = vmax.f32 %v2176, 0.0
  %v2209 = vmax.f32 %v2177, 0.0
  %v2210 = vmax.f32 %v2178, 0.0
  %v2211 = vmax.f32 %v2179, 0.0
  %v2212 = vmax.f32 %v2180, 0.0
  %v2213 = vmax.f32 %v2181, 0.0
  %v2214 = vmax.f32 %v2182, 0.0
  %v2215 = vmax.f32 %v2183, 0.0
  %v2216 = vmax.f32 %v2184, 0.0
  %v2217 = vmax.f32 %v2185, 0.0
  %v2218 = vmax.f32 %v2186, 0.0
  %v2219 = vmax.f32 %v2187, 0.0
  %v2220 = vmax.f32 %v2188, 0.0
  %v2221 = vmax.f32 %v2189, 0.0
  %v2222 = vmax.f32 %v2190, 0.0
  %v2223 = vmax.f32 %v2191, 0.0
  %v2224 = vmax.f32 %v2192, 0.0
  %v2225 = vmax.f32 %v2193, 0.0
  %v2226 = vmax.f32 %v2194, 0.0
  %v2227 = vmax.f32 %v2195, 0.0
  %v2228 = vadd.f32 %v2196, %v2197
  %v2229 = vadd.f32 %v2228, %v2198
  %v2230 = vadd.f32 %v2229, %v2199
  %v2231 = vadd.f32 %v2230, %v2200
  %v2232 = vadd.f32 %v2231, %v2201
  %v2233 = vadd.f32 %v2232, %v2202
  %v2234 = vadd.f32 %v2233, %v2203
  %2235 = vadd.xlane.f32.xlu0 %v2234
  %v2236 = vpop.xlane.xlu0 %2235
  %v2237 = vadd.f32 %v2204, %v2205
  %v2238 = vadd.f32 %v2237, %v2206
  %v2239 = vadd.f32 %v2238, %v2207
  %v2240 = vadd.f32 %v2239, %v2208
  %v2241 = vadd.f32 %v2240, %v2209
  %v2242 = vadd.f32 %v2241, %v2210
  %v2243 = vadd.f32 %v2242, %v2211
  %2244 = vadd.xlane.f32.xlu0 %v2243
  %v2245 = vpop.xlane.xlu0 %2244
  %v2246 = vadd.f32 %v2212, %v2213
  %v2247 = vadd.f32 %v2246, %v2214
  %v2248 = vadd.f32 %v2247, %v2215
  %v2249 = vadd.f32 %v2248, %v2216
  %v2250 = vadd.f32 %v2249, %v2217
  %v2251 = vadd.f32 %v2250, %v2218
  %v2252 = vadd.f32 %v2251, %v2219
  %2253 = vadd.xlane.f32.xlu0 %v2252
  %v2254 = vpop.xlane.xlu0 %2253
  %v2255 = vadd.f32 %v2220, %v2221
  %v2256 = vadd.f32 %v2255, %v2222
  %v2257 = vadd.f32 %v2256, %v2223
  %v2258 = vadd.f32 %v2257, %v2224
  %v2259 = vadd.f32 %v2258, %v2225
  %v2260 = vadd.f32 %v2259, %v2226
  %v2261 = vadd.f32 %v2260, %v2227
  %2262 = vadd.xlane.f32.xlu0 %v2261
  %v2263 = vpop.xlane.xlu0 %2262
  %v2264 = vmul.f32 %v2236, 0.0009765625
  %v2265 = vmul.f32 %v2245, 0.0009765625
  %v2266 = vmul.f32 %v2254, 0.0009765625
  %v2267 = vmul.f32 %v2263, 0.0009765625
  %v2272 = vlaneseq
  %v2273 = vand.u32 %v2272, 127
  %v2274 = vlaneseq
  %v2275 = vshrl.u32 %v2274, 7
  %v2276 = vsub.s32 %v2273, %v2275
  %v2277 = vrot.slane %v2264, %v2276
  %v2278 = vadd.s32 %v2273, 4294967288
  %v2279 = vlaneseq
  %v2280 = vshrl.u32 %v2279, 7
  %v2281 = vsub.s32 %v2278, %v2280
  %v2282 = vrot.slane %v2265, %v2281
  %vm2283 = vcmask 130112
  %v2284 = vsel %vm2283, %v2282, %v2277
  %v2285 = vadd.s32 %v2273, 4294967280
  %v2286 = vlaneseq
  %v2287 = vshrl.u32 %v2286, 7
  %v2288 = vsub.s32 %v2285, %v2287
  %v2289 = vrot.slane %v2266, %v2288
  %vm2290 = vcmask 195712
  %v2291 = vsel %vm2290, %v2289, %v2284
  %v2292 = vadd.s32 %v2273, 4294967272
  %v2293 = vlaneseq
  %v2294 = vshrl.u32 %v2293, 7
  %v2295 = vsub.s32 %v2292, %v2294
  %v2296 = vrot.slane %v2267, %v2295
  %vm2297 = vcmask 261312
  %v2298 = vsel %vm2297, %v2296, %v2291
  %vm2300 = vcmask 253952
  %2301 = vst.msk [vmem:[%s5] sm:$0x1] %vm2300, %v2298
  %v2302 = vadd.f32 %v1787, %v2083
  %v2303 = vadd.f32 %v1789, %v2083
  %v2304 = vadd.f32 %v1876, %v2083
  %v2305 = vadd.f32 %v1878, %v2083
  %v2306 = vadd.f32 %v1965, %v2083
  %v2307 = vadd.f32 %v1967, %v2083
  %v2308 = vadd.f32 %v2054, %v2083
  %v2309 = vadd.f32 %v2056, %v2083
  %v2310 = vadd.f32 %v1793, %v2088
  %v2311 = vadd.f32 %v1795, %v2088
  %v2312 = vadd.f32 %v1882, %v2088
  %v2313 = vadd.f32 %v1884, %v2088
  %v2314 = vadd.f32 %v1971, %v2088
  %v2315 = vadd.f32 %v1973, %v2088
  %v2316 = vadd.f32 %v2060, %v2088
  %v2317 = vadd.f32 %v2062, %v2088
  %v2318 = vadd.f32 %v1799, %v2093
  %v2319 = vadd.f32 %v1801, %v2093
  %v2320 = vadd.f32 %v1888, %v2093
  %v2321 = vadd.f32 %v1890, %v2093
  %v2322 = vadd.f32 %v1977, %v2093
  %v2323 = vadd.f32 %v1979, %v2093
  %v2324 = vadd.f32 %v2066, %v2093
  %v2325 = vadd.f32 %v2068, %v2093
  %v2326 = vadd.f32 %v1805, %v2098
  %v2327 = vadd.f32 %v1807, %v2098
  %v2328 = vadd.f32 %v1894, %v2098
  %v2329 = vadd.f32 %v1896, %v2098
  %v2330 = vadd.f32 %v1983, %v2098
  %v2331 = vadd.f32 %v1985, %v2098
  %v2332 = vadd.f32 %v2072, %v2098
  %v2333 = vadd.f32 %v2074, %v2098
  %v2334 = vld [vmem:[#allocation2 + $0x40] sm:$0xff]
  %v2335 = vld [vmem:[#allocation2 + $0x48] sm:$0xff]
  %v2336 = vld [vmem:[#allocation2 + $0x50] sm:$0xff]
  %v2337 = vld [vmem:[#allocation2 + $0x58] sm:$0xff]
  %v2338 = vld [vmem:[#allocation2 + $0x60] sm:$0xff]
  %v2339 = vld [vmem:[#allocation2 + $0x68] sm:$0xff]
  %v2340 = vld [vmem:[#allocation2 + $0x70] sm:$0xff]
  %v2341 = vld [vmem:[#allocation2 + $0x78] sm:$0xff]
  %v2342 = vld [vmem:[#allocation2 + $0xc0] sm:$0xff]
  %v2343 = vld [vmem:[#allocation2 + $0xc8] sm:$0xff]
  %v2344 = vld [vmem:[#allocation2 + $0xd0] sm:$0xff]
  %v2345 = vld [vmem:[#allocation2 + $0xd8] sm:$0xff]
  %v2346 = vld [vmem:[#allocation2 + $0xe0] sm:$0xff]
  %v2347 = vld [vmem:[#allocation2 + $0xe8] sm:$0xff]
  %v2348 = vld [vmem:[#allocation2 + $0xf0] sm:$0xff]
  %v2349 = vld [vmem:[#allocation2 + $0xf8] sm:$0xff]
  %v2350 = vld [vmem:[#allocation2 + $0x140] sm:$0xff]
  %v2351 = vld [vmem:[#allocation2 + $0x148] sm:$0xff]
  %v2352 = vld [vmem:[#allocation2 + $0x150] sm:$0xff]
  %v2353 = vld [vmem:[#allocation2 + $0x158] sm:$0xff]
  %v2354 = vld [vmem:[#allocation2 + $0x160] sm:$0xff]
  %v2355 = vld [vmem:[#allocation2 + $0x168] sm:$0xff]
  %v2356 = vld [vmem:[#allocation2 + $0x170] sm:$0xff]
  %v2357 = vld [vmem:[#allocation2 + $0x178] sm:$0xff]
  %v2358 = vld [vmem:[#allocation2 + $0x1c0] sm:$0xff]
  %v2359 = vld [vmem:[#allocation2 + $0x1c8] sm:$0xff]
  %v2360 = vld [vmem:[#allocation2 + $0x1d0] sm:$0xff]
  %v2361 = vld [vmem:[#allocation2 + $0x1d8] sm:$0xff]
  %v2362 = vld [vmem:[#allocation2 + $0x1e0] sm:$0xff]
  %v2363 = vld [vmem:[#allocation2 + $0x1e8] sm:$0xff]
  %v2364 = vld [vmem:[#allocation2 + $0x1f0] sm:$0xff]
  %v2365 = vld [vmem:[#allocation2 + $0x1f8] sm:$0xff]
  %v2366 = vadd.f32 %v2302, %v2334
  %v2367 = vadd.f32 %v2303, %v2335
  %v2368 = vadd.f32 %v2304, %v2336
  %v2369 = vadd.f32 %v2305, %v2337
  %v2370 = vadd.f32 %v2306, %v2338
  %v2371 = vadd.f32 %v2307, %v2339
  %v2372 = vadd.f32 %v2308, %v2340
  %v2373 = vadd.f32 %v2309, %v2341
  %v2374 = vadd.f32 %v2310, %v2342
  %v2375 = vadd.f32 %v2311, %v2343
  %v2376 = vadd.f32 %v2312, %v2344
  %v2377 = vadd.f32 %v2313, %v2345
  %v2378 = vadd.f32 %v2314, %v2346
  %v2379 = vadd.f32 %v2315, %v2347
  %v2380 = vadd.f32 %v2316, %v2348
  %v2381 = vadd.f32 %v2317, %v2349
  %v2382 = vadd.f32 %v2318, %v2350
  %v2383 = vadd.f32 %v2319, %v2351
  %v2384 = vadd.f32 %v2320, %v2352
  %v2385 = vadd.f32 %v2321, %v2353
  %v2386 = vadd.f32 %v2322, %v2354
  %v2387 = vadd.f32 %v2323, %v2355
  %v2388 = vadd.f32 %v2324, %v2356
  %v2389 = vadd.f32 %v2325, %v2357
  %v2390 = vadd.f32 %v2326, %v2358
  %v2391 = vadd.f32 %v2327, %v2359
  %v2392 = vadd.f32 %v2328, %v2360
  %v2393 = vadd.f32 %v2329, %v2361
  %v2394 = vadd.f32 %v2330, %v2362
  %v2395 = vadd.f32 %v2331, %v2363
  %v2396 = vadd.f32 %v2332, %v2364
  %v2397 = vadd.f32 %v2333, %v2365
  %v2398 = vmax.f32 %v2366, 0.0
  %v2399 = vmax.f32 %v2367, 0.0
  %v2400 = vmax.f32 %v2368, 0.0
  %v2401 = vmax.f32 %v2369, 0.0
  %v2402 = vmax.f32 %v2370, 0.0
  %v2403 = vmax.f32 %v2371, 0.0
  %v2404 = vmax.f32 %v2372, 0.0
  %v2405 = vmax.f32 %v2373, 0.0
  %v2406 = vmax.f32 %v2374, 0.0
  %v2407 = vmax.f32 %v2375, 0.0
  %v2408 = vmax.f32 %v2376, 0.0
  %v2409 = vmax.f32 %v2377, 0.0
  %v2410 = vmax.f32 %v2378, 0.0
  %v2411 = vmax.f32 %v2379, 0.0
  %v2412 = vmax.f32 %v2380, 0.0
  %v2413 = vmax.f32 %v2381, 0.0
  %v2414 = vmax.f32 %v2382, 0.0
  %v2415 = vmax.f32 %v2383, 0.0
  %v2416 = vmax.f32 %v2384, 0.0
  %v2417 = vmax.f32 %v2385, 0.0
  %v2418 = vmax.f32 %v2386, 0.0
  %v2419 = vmax.f32 %v2387, 0.0
  %v2420 = vmax.f32 %v2388, 0.0
  %v2421 = vmax.f32 %v2389, 0.0
  %v2422 = vmax.f32 %v2390, 0.0
  %v2423 = vmax.f32 %v2391, 0.0
  %v2424 = vmax.f32 %v2392, 0.0
  %v2425 = vmax.f32 %v2393, 0.0
  %v2426 = vmax.f32 %v2394, 0.0
  %v2427 = vmax.f32 %v2395, 0.0
  %v2428 = vmax.f32 %v2396, 0.0
  %v2429 = vmax.f32 %v2397, 0.0
  %v2430 = vadd.f32 %v2398, %v2399
  %v2431 = vadd.f32 %v2430, %v2400
  %v2432 = vadd.f32 %v2431, %v2401
  %v2433 = vadd.f32 %v2432, %v2402
  %v2434 = vadd.f32 %v2433, %v2403
  %v2435 = vadd.f32 %v2434, %v2404
  %v2436 = vadd.f32 %v2435, %v2405
  %2437 = vadd.xlane.f32.xlu0 %v2436
  %v2438 = vpop.xlane.xlu0 %2437
  %v2439 = vadd.f32 %v2406, %v2407
  %v2440 = vadd.f32 %v2439, %v2408
  %v2441 = vadd.f32 %v2440, %v2409
  %v2442 = vadd.f32 %v2441, %v2410
  %v2443 = vadd.f32 %v2442, %v2411
  %v2444 = vadd.f32 %v2443, %v2412
  %v2445 = vadd.f32 %v2444, %v2413
  %2446 = vadd.xlane.f32.xlu0 %v2445
  %v2447 = vpop.xlane.xlu0 %2446
  %v2448 = vadd.f32 %v2414, %v2415
  %v2449 = vadd.f32 %v2448, %v2416
  %v2450 = vadd.f32 %v2449, %v2417
  %v2451 = vadd.f32 %v2450, %v2418
  %v2452 = vadd.f32 %v2451, %v2419
  %v2453 = vadd.f32 %v2452, %v2420
  %v2454 = vadd.f32 %v2453, %v2421
  %2455 = vadd.xlane.f32.xlu0 %v2454
  %v2456 = vpop.xlane.xlu0 %2455
  %v2457 = vadd.f32 %v2422, %v2423
  %v2458 = vadd.f32 %v2457, %v2424
  %v2459 = vadd.f32 %v2458, %v2425
  %v2460 = vadd.f32 %v2459, %v2426
  %v2461 = vadd.f32 %v2460, %v2427
  %v2462 = vadd.f32 %v2461, %v2428
  %v2463 = vadd.f32 %v2462, %v2429
  %2464 = vadd.xlane.f32.xlu0 %v2463
  %v2465 = vpop.xlane.xlu0 %2464
  %v2466 = vmul.f32 %v2438, 0.0009765625
  %v2467 = vmul.f32 %v2447, 0.0009765625
  %v2468 = vmul.f32 %v2456, 0.0009765625
  %v2469 = vmul.f32 %v2465, 0.0009765625
  %v2474 = vlaneseq
  %v2475 = vshrl.u32 %v2474, 7
  %v2476 = vsub.s32 %v2273, %v2475
  %v2477 = vrot.slane %v2466, %v2476
  %v2478 = vlaneseq
  %v2479 = vshrl.u32 %v2478, 7
  %v2480 = vsub.s32 %v2278, %v2479
  %v2481 = vrot.slane %v2467, %v2480
  %v2482 = vsel %vm2283, %v2481, %v2477
  %v2483 = vlaneseq
  %v2484 = vshrl.u32 %v2483, 7
  %v2485 = vsub.s32 %v2285, %v2484
  %v2486 = vrot.slane %v2468, %v2485
  %v2487 = vsel %vm2290, %v2486, %v2482
  %v2488 = vlaneseq
  %v2489 = vshrl.u32 %v2488, 7
  %v2490 = vsub.s32 %v2292, %v2489
  %v2491 = vrot.slane %v2469, %v2490
  %v2492 = vsel %vm2297, %v2491, %v2487
  %s2494 = scalar_lea.vmem %s5, 1
  %2495 = vst.msk [vmem:[%s2494] sm:$0x1] %vm2300, %v2492
  // Predicated region
  $region22: #{tsn_forward.1} parent=0 // pred_check
    _
  $region23: #{tsn_forward.1} parent=0 // pred_check_branch
    %2497 = sbr.rel (0) target = $region25
  $region24: #{tsn_forward.1} parent=0 // pred_region
    _
  $region25: #{tsn_forward.1} parent=0 // pred_fallthru
    _
  // Predicated region
  $region26: #{tsn_forward.1} parent=0 // pred_check
    _
  $region27: #{tsn_forward.1} parent=0 // pred_check_branch
    %2499 = sbr.rel (0) target = $region29
  $region28: #{tsn_forward.1} parent=0 // pred_region
    _
  $region29: #{tsn_forward.1} parent=0 // pred_fallthru
    _

</llo_original>
